<compile_context>
chip_gen: v6e
topology: v6e:2x2x1
jax: 0.10.0
libtpu: 0.0.40
codegen_flags: <defaults>
</compile_context>

<pallas_src>
import functools

import jax
import jax.numpy as jnp
from jax.experimental import pallas as pl
from jax.experimental.pallas import tpu as pltpu


def _round_up(x, m):
    return (x + m - 1) // m * m


def _vmem_limit(resident_bytes):
    # 2x margin over the actual resident buffers, never below the platform
    # defaults, kept under v7x's 64 MiB physical VMEM.
    return int(min(60 * 2 ** 20, max(32 * 2 ** 20, 2 * resident_bytes)))


# ----------------------- fused GRU (projection + recurrence) ---------------- #

def _gru_kernel(x_ref, wih_ref, bgi_ref, whh_ref, bhn_ref, out_ref,
                gi_scr, h_scr, *, hp, stride, spc, unroll):
    """One grid step = one (batch-tile, time-chunk) of spc*stride timesteps.

    x_ref  : (tc, bt, ninp)        raw inputs for this chunk (param dtype)
    gi_scr : (tc, bt, 3*hp) f32    per-chunk x @ W_ih + (b_ih + b_hh[r,z])
    h_scr  : (bt, hp) f32          hidden state carried across time chunks
    out_ref: (spc, bt, hp) f32     sampled hidden states (every stride-th)
    """
    c = pl.program_id(1)                      # time-chunk index (serial axis)

    @pl.when(c == 0)
    def _():
        h_scr[...] = jnp.zeros_like(h_scr)

    tc, bt, ninp = x_ref.shape

    # --- fused input projection: one GEMM per chunk, result stays in VMEM ---
    x2d = x_ref[...].reshape(tc * bt, ninp)
    gi = jnp.dot(x2d, wih_ref[...], preferred_element_type=jnp.float32)
    gi_scr[...] = (gi + bgi_ref[...]).reshape(tc, bt, 3 * hp)

    w_hh = whh_ref[...]                                   # loaded once per chunk
    bhn = jnp.broadcast_to(bhn_ref[...], (bt, hp))        # hoisted broadcast

    def cell(t, h):
        gi_t = gi_scr[t]                                  # (bt, 3*hp) f32
        gh = jnp.dot(h.astype(w_hh.dtype), w_hh,
                     preferred_element_type=jnp.float32)  # (bt, 3*hp) f32
        # hp % 128 == 0 -> all gate slices are lane-aligned whole blocks.
        rz = jax.nn.sigmoid(gi_t[:, :2 * hp] + gh[:, :2 * hp])
        r = rz[:, :hp]
        z = rz[:, hp:]
        n = jnp.tanh(gi_t[:, 2 * hp:] + r * (gh[:, 2 * hp:] + bhn))
        return (1.0 - z) * n + z * h

    def sample_body(s, h):
        t0 = s * stride
        h = cell(t0, h)
        out_ref[s] = h.astype(out_ref.dtype)              # = output[s*stride]
        for k in range(1, stride):                        # intra-stride: fully unrolled
            h = cell(t0 + k, h)
        return h

    h = jax.lax.fori_loop(0, spc, sample_body, h_scr[...], unroll=unroll)
    h_scr[...] = h


def gru_sampled_forward(x, w_ih, b_gi, w_hh, b_hn, *, stride, hp,
                        time_chunk_target=128, sample_unroll=4):
    """x: (T, Bp, ninp) -> f32 sampled hidden states (Ts_pad, Bp, hp) at
    t = 0, stride, 2*stride, ...  (Ts_pad >= ceil(T/stride); pads sliced off by caller)."""
    T, Bp, ninp = x.shape

    samples_total = -(-T // stride)
    spc = max(1, min(max(1, time_chunk_target // stride), samples_total))
    if spc > sample_unroll:
        spc = (spc // sample_unroll) * sample_unroll      # keep unroll | spc
    unroll = spc if spc <= sample_unroll else sample_unroll
    tc = spc * stride

    Ts_pad = _round_up(samples_total, spc)
    T_pad = Ts_pad * stride
    if T_pad != T:
        # Padded timesteps only keep evolving h past T; harmless because h_n is
        # discarded and padded samples are sliced off by the caller.
        # TODO(synk): guard padded steps with a scalar-prefetch bound if h_n is ever used.
        x = jnp.pad(x, ((0, T_pad - T), (0, 0), (0, 0)))
    n_chunks = T_pad // tc

    # Batch tiling: >= 2 "parallel" tiles lets the serial recurrence use both
    # TensorCores on v7x; tiles stay a multiple of 8 sublanes.
    bt = Bp // 2 if (Bp >= 16 and (Bp // 2) % 8 == 0) else Bp
    n_btiles = Bp // bt

    itm = jnp.dtype(x.dtype).itemsize
    resident = (2 * (tc * bt * ninp * itm + ninp * 3 * hp * itm + 3 * hp * 4
                     + hp * 3 * hp * itm + hp * 4 + spc * bt * hp * 4)
                + tc * bt * 3 * hp * 4 + bt * hp * 4)

    kernel = functools.partial(_gru_kernel, hp=hp, stride=stride, spc=spc,
                               unroll=unroll)
    return pl.pallas_call(
        kernel,
        out_shape=jax.ShapeDtypeStruct((Ts_pad, Bp, hp), jnp.float32),
        grid_spec=pltpu.PrefetchScalarGridSpec(
            num_scalar_prefetch=0,
            grid=(n_btiles, n_chunks),
            in_specs=[
                pl.BlockSpec((tc, bt, ninp), lambda b, c: (c, b, 0)),
                # TODO(synk): pipeline_mode=pl.Buffered(1) on these constant-index
                # weight blocks would halve their resident VMEM on v7x.
                pl.BlockSpec((ninp, 3 * hp), lambda b, c: (0, 0)),
                pl.BlockSpec((1, 3 * hp), lambda b, c: (0, 0)),
                pl.BlockSpec((hp, 3 * hp), lambda b, c: (0, 0)),
                pl.BlockSpec((1, hp), lambda b, c: (0, 0)),
            ],
            out_specs=pl.BlockSpec((spc, bt, hp), lambda b, c: (c, b, 0)),
            scratch_shapes=[
                pltpu.VMEM((tc, bt, 3 * hp), jnp.float32),   # per-chunk gi
                pltpu.VMEM((bt, hp), jnp.float32),           # carried hidden state
            ],
        ),
        compiler_params=pltpu.CompilerParams(
            dimension_semantics=("parallel", "arbitrary"),
            vmem_limit_bytes=_vmem_limit(resident)),
    )(x, w_ih, b_gi, w_hh, b_hn)


# ----------------------------- MLP head kernel ------------------------------ #

def _mlp_kernel(x_ref, w1_ref, b1_ref, w2_ref, b2_ref, w3_ref, b3_ref, o_ref):
    w1 = w1_ref[...]
    h = jnp.dot(x_ref[...].astype(w1.dtype), w1,
                preferred_element_type=jnp.float32) + b1_ref[...]
    h = jnp.maximum(h, 0.0)
    w2 = w2_ref[...]
    h = jnp.dot(h.astype(w2.dtype), w2,
                preferred_element_type=jnp.float32) + b2_ref[...]
    h = jnp.maximum(h, 0.0)
    w3 = w3_ref[...]
    o = jnp.dot(h.astype(w3.dtype), w3,
                preferred_element_type=jnp.float32) + b3_ref[...]
    o_ref[...] = o.astype(o_ref.dtype)


def mlp_forward(x2d, w1, b1, w2, b2, w3, b3, *, row_tile=512):
    """x2d: (N, hp) -> (N, op) f32.  Row-tiled, parallel, lane-dense (op%128==0) stores."""
    N, hp = x2d.shape
    lp = w1.shape[1]
    op = w3.shape[1]
    tn = min(row_tile, N)
    n_pad = _round_up(N, tn)
    if n_pad != N:
        x2d = jnp.pad(x2d, ((0, n_pad - N), (0, 0)))

    witm = jnp.dtype(w1.dtype).itemsize
    resident = 2 * (tn * hp * jnp.dtype(x2d.dtype).itemsize
                    + (hp * lp + lp * lp + lp * op) * witm
                    + (2 * lp + op) * 4 + tn * op * 4)

    out = pl.pallas_call(
        _mlp_kernel,
        out_shape=jax.ShapeDtypeStruct((n_pad, op), jnp.float32),
        grid_spec=pltpu.PrefetchScalarGridSpec(
            num_scalar_prefetch=0,
            grid=(n_pad // tn,),
            in_specs=[
                pl.BlockSpec((tn, hp), lambda i: (i, 0)),
                pl.BlockSpec((hp, lp), lambda i: (0, 0)),
                pl.BlockSpec((1, lp), lambda i: (0, 0)),
                pl.BlockSpec((lp, lp), lambda i: (0, 0)),
                pl.BlockSpec((1, lp), lambda i: (0, 0)),
                pl.BlockSpec((lp, op), lambda i: (0, 0)),
                pl.BlockSpec((1, op), lambda i: (0, 0)),
            ],
            out_specs=pl.BlockSpec((tn, op), lambda i: (i, 0)),
        ),
        compiler_params=pltpu.CompilerParams(
            dimension_semantics=("parallel",),
            vmem_limit_bytes=_vmem_limit(resident)),
    )(x2d, w1, b1, w2, b2, w3, b3)
    return out[:N]


# ----------------------------- Parameters ----------------------------------- #

def init_params(key, ninp, nhid, nout, nlinear_hid):
    ks = jax.random.split(key, 10)
    s_gru = 1.0 / jnp.sqrt(nhid)
    u = lambda k, shape, s: jax.random.uniform(k, shape, jnp.float32, -s, s)
    return {
        # GRU weights stored transposed: (in, 3*nhid), gate order [r|z|n]
        "w_ih": u(ks[0], (ninp, 3 * nhid), s_gru),
        "w_hh": u(ks[1], (nhid, 3 * nhid), s_gru),
        "b_ih": u(ks[2], (1, 3 * nhid), s_gru),
        "b_hh": u(ks[3], (1, 3 * nhid), s_gru),
        # out_linear MLP (nlinear_layers=2): nhid->H, ReLU, H->H, ReLU, H->nout
        "w1": u(ks[4], (nhid, nlinear_hid), 1.0 / jnp.sqrt(nhid)),
        "b1": u(ks[5], (1, nlinear_hid), 1.0 / jnp.sqrt(nhid)),
        "w2": u(ks[6], (nlinear_hid, nlinear_hid), 1.0 / jnp.sqrt(nlinear_hid)),
        "b2": u(ks[7], (1, nlinear_hid), 1.0 / jnp.sqrt(nlinear_hid)),
        "w3": u(ks[8], (nlinear_hid, nout), 1.0 / jnp.sqrt(nlinear_hid)),
        "b3": u(ks[9], (1, nout), 1.0 / jnp.sqrt(nlinear_hid)),
    }


def prepare_params(params, *, dtype=jnp.float32):
    """Pad all feature dims to lane-dense 128-multiples (gate-major for the GRU),
    fold biases, and cast streamed weights to `dtype`.  Padded rows/cols are zero
    so padded lanes stay exactly zero through the recurrence and the MLP."""
    nhid = params["w_hh"].shape[0]
    nlin = params["w1"].shape[1]
    nout = params["w3"].shape[1]
    hp = _round_up(nhid, 128)
    lp = _round_up(nlin, 128)
    op = _round_up(nout, 128)

    def pad_gate_cols(w, n, npad):   # (rows, 3n) -> (rows, 3*npad), gate-major
        return jnp.concatenate(
            [jnp.pad(w[:, g * n:(g + 1) * n], ((0, 0), (0, npad - n)))
             for g in range(3)], axis=1)

    w_ih = pad_gate_cols(params["w_ih"], nhid, hp)                          # (ninp, 3hp)
    w_hh = jnp.pad(pad_gate_cols(params["w_hh"], nhid, hp),
                   ((0, hp - nhid), (0, 0)))                                # (hp, 3hp)
    # Fold b_ih + b_hh[r,z] into the gi bias; keep b_hn separate (r * (...)).
    b_gi = params["b_ih"] + jnp.concatenate(
        [params["b_hh"][:, :2 * nhid],
         jnp.zeros((1, nhid), params["b_hh"].dtype)], axis=1)
    b_gi = pad_gate_cols(b_gi, nhid, hp)                                    # (1, 3hp)
    b_hn = jnp.pad(params["b_hh"][:, 2 * nhid:], ((0, 0), (0, hp - nhid)))  # (1, hp)

    w1 = jnp.pad(params["w1"], ((0, hp - nhid), (0, lp - nlin)))
    b1 = jnp.pad(params["b1"], ((0, 0), (0, lp - nlin)))
    w2 = jnp.pad(params["w2"], ((0, lp - nlin), (0, lp - nlin)))
    b2 = jnp.pad(params["b2"], ((0, 0), (0, lp - nlin)))
    w3 = jnp.pad(params["w3"], ((0, lp - nlin), (0, op - nout)))
    b3 = jnp.pad(params["b3"], ((0, 0), (0, op - nout)))

    f32 = jnp.float32
    return {
        "w_ih": w_ih.astype(dtype), "w_hh": w_hh.astype(dtype),
        "b_gi": b_gi.astype(f32), "b_hn": b_hn.astype(f32),
        "w1": w1.astype(dtype), "b1": b1.astype(f32),
        "w2": w2.astype(dtype), "b2": b2.astype(f32),
        "w3": w3.astype(dtype), "b3": b3.astype(f32),
        "nhid": nhid, "nout": nout, "hp": hp, "lp": lp, "op": op,
        "dtype": dtype,
    }


# ----------------------------- Full module ---------------------------------- #

def sequence_encoder_forward(prep, inputs, stride):
    """inputs: (T, B, ninp) -> (ceil(T/stride), B, nout), matching
    out_linear(gru(inputs)[0][::stride]) of the PyTorch module."""
    T, B, ninp = inputs.shape
    hp, nout = prep["hp"], prep["nout"]

    # Pad batch to a sublane-dense multiple of 8 (padded rows are independent).
    Bp = max(8, _round_up(B, 8))
    x = inputs.astype(prep["dtype"])
    if Bp != B:
        x = jnp.pad(x, ((0, 0), (0, Bp - B), (0, 0)))

    # Fused input-projection + recurrence; writes every stride-th hidden state.
    sampled = gru_sampled_forward(x, prep["w_ih"], prep["b_gi"],
                                  prep["w_hh"], prep["b_hn"],
                                  stride=stride, hp=hp)       # (Ts_pad, Bp, hp) f32

    Ts = -(-T // stride)
    out2d = mlp_forward(sampled.reshape(-1, hp),
                        prep["w1"], prep["b1"], prep["w2"], prep["b2"],
                        prep["w3"], prep["b3"])               # (Ts_pad*Bp, op) f32
    out3d = out2d.reshape(sampled.shape[0], Bp, -1)
    # TODO(synk): hid_linear(h_n) is computed then discarded in the PyTorch forward; omitted.
    # TODO(synk): optionally fuse the MLP head into the GRU chunk epilogue to skip
    #             the sampled-hidden HBM round trip.
    return out3d[:Ts, :B, :nout]


# ----------------------------- Reference (pure JAX) -------------------------- #

def _reference_forward(params, inputs, stride):
    nhid = params["w_hh"].shape[0]

    def step(h, x_t):
        gi = x_t @ params["w_ih"] + params["b_ih"]
        gh = h @ params["w_hh"] + params["b_hh"]
        r = jax.nn.sigmoid(gi[:, :nhid] + gh[:, :nhid])
        z = jax.nn.sigmoid(gi[:, nhid:2 * nhid] + gh[:, nhid:2 * nhid])
        n = jnp.tanh(gi[:, 2 * nhid:] + r * gh[:, 2 * nhid:])
        h_new = (1.0 - z) * n + z * h
        return h_new, h_new

    h0 = jnp.zeros((inputs.shape[1], nhid), jnp.float32)
    _, outs = jax.lax.scan(step, h0, inputs)
    sampled = outs[::stride]
    h = jnp.maximum(sampled @ params["w1"] + params["b1"], 0.0)
    h = jnp.maximum(h @ params["w2"] + params["b2"], 0.0)
    return h @ params["w3"] + params["b3"]


# ----------------------------- Main ----------------------------------------- #

if __name__ == "__main__":
    seq_len, batch, ninp = 8, 4, 8
    nhid, nout, nlinear_hid = 32, 16, 64
    stride = 2  # ninp_per_output

    key = jax.random.PRNGKey(0)
    k_x, k_p = jax.random.split(key)
    inputs = jax.random.normal(k_x, (seq_len, batch, ninp), jnp.float32)
    params = init_params(k_p, ninp, nhid, nout, nlinear_hid)

    ref = _reference_forward(params, inputs, stride)

    # f32 config: strict check against the pure-JAX reference.
    out_f32 = sequence_encoder_forward(prepare_params(params, dtype=jnp.float32),
                                       inputs, stride)
    out_f32 = jax.block_until_ready(out_f32)
    assert out_f32.shape == (seq_len // stride, batch, nout), out_f32.shape
    assert jnp.allclose(out_f32, ref, atol=1e-4, rtol=1e-4), "f32 mismatch vs reference"

    # bf16 weight / x streaming (perf config, f32 state + accumulation inside).
    out_bf16 = sequence_encoder_forward(prepare_params(params, dtype=jnp.bfloat16),
                                        inputs, stride)
    out_bf16 = jax.block_until_ready(out_bf16)
    assert out_bf16.shape == out_f32.shape
    assert jnp.allclose(out_bf16, ref, atol=1e-1, rtol=1e-1), "bf16 mismatch vs reference"

    print("KERNEL_OK")
</pallas_src>

<mosaic_0001>
module attributes {stable_mosaic.version = 11 : i64} {
  func.func @_gru_kernel(%arg0: i32, %arg1: i32, %arg2: memref<8x8x8xf32, #tpu.memory_space<vmem>>, %arg3: memref<8x384xf32, #tpu.memory_space<vmem>>, %arg4: memref<1x384xf32, #tpu.memory_space<vmem>>, %arg5: memref<128x384xf32, #tpu.memory_space<vmem>>, %arg6: memref<1x128xf32, #tpu.memory_space<vmem>>, %arg7: memref<4x8x128xf32, #tpu.memory_space<vmem>>, %arg8: memref<8x8x384xf32, #tpu.memory_space<vmem>>, %arg9: memref<8x128xf32, #tpu.memory_space<vmem>>) attributes {dimension_semantics = [#tpu.dimension_semantics<parallel>, #tpu.dimension_semantics<arbitrary>], iteration_bounds = array<i64: 1, 1>, scalar_prefetch = 0 : i64, scratch_operands = 2 : i64, tpu.core_type = #tpu.core_type<tc>, window_params = [{transform_indices = @transform_0, window_bounds = array<i64: 8, 8, 8>}, {pipeline_mode = #tpu.pipeline_mode<synchronous>, transform_indices = @transform_1, window_bounds = array<i64: 8, 384>}, {pipeline_mode = #tpu.pipeline_mode<synchronous>, transform_indices = @transform_2, window_bounds = array<i64: 1, 384>}, {pipeline_mode = #tpu.pipeline_mode<synchronous>, transform_indices = @transform_3, window_bounds = array<i64: 128, 384>}, {pipeline_mode = #tpu.pipeline_mode<synchronous>, transform_indices = @transform_4, window_bounds = array<i64: 1, 128>}, {transform_indices = @transform_5, window_bounds = array<i64: 4, 8, 128>}]} {
    %c0_i32 = arith.constant 0 : i32
    %0 = arith.cmpi eq, %arg1, %c0_i32 : i32
    %1 = arith.extui %0 : i1 to i32
    %c0_i32_0 = arith.constant 0 : i32
    %2 = arith.cmpi ne, %1, %c0_i32_0 : i32
    scf.if %2 {
      %cst_75 = arith.constant 0.000000e+00 : f32
      %242 = vector.broadcast %cst_75 : f32 to vector<8x128xf32>
      %c0_76 = arith.constant 0 : index
      %c0_77 = arith.constant 0 : index
      %243 = vector.load %arg9[%c0_76, %c0_77] : memref<8x128xf32, #tpu.memory_space<vmem>>, vector<8x128xf32>
      tpu.vector_store %arg9[%c0_76, %c0_77], %242 {strides = array<i32>} : memref<8x128xf32, #tpu.memory_space<vmem>>, vector<8x128xf32>,
    } else {
    }
    %c0 = arith.constant 0 : index
    %c0_1 = arith.constant 0 : index
    %c0_2 = arith.constant 0 : index
    %3 = vector.load %arg2[%c0, %c0_1, %c0_2] : memref<8x8x8xf32, #tpu.memory_space<vmem>>, vector<8x8x8xf32>
    %4 = vector.shape_cast %3 : vector<8x8x8xf32> to vector<64x8xf32>
    %c0_3 = arith.constant 0 : index
    %c0_4 = arith.constant 0 : index
    %5 = vector.load %arg3[%c0_3, %c0_4] : memref<8x384xf32, #tpu.memory_space<vmem>>, vector<8x384xf32>
    %cst = arith.constant dense<0.000000e+00> : vector<64x384xf32>
    %6 = tpu.matmul %4, %5, %cst {dimension_numbers = #tpu.dot_dimension_numbers<[1], [0], [0], [1], [0, 0, 1, 1], [], []>} : vector<64x8xf32>, vector<8x384xf32>, vector<64x384xf32> -> vector<64x384xf32>
    %c0_5 = arith.constant 0 : index
    %c0_6 = arith.constant 0 : index
    %7 = vector.load %arg4[%c0_5, %c0_6] : memref<1x384xf32, #tpu.memory_space<vmem>>, vector<1x384xf32>
    %8 = vector.broadcast %7 : vector<1x384xf32> to vector<64x384xf32>
    %9 = arith.addf %6, %8 : vector<64x384xf32>
    %10 = vector.shape_cast %9 : vector<64x384xf32> to vector<8x8x384xf32>
    %c0_7 = arith.constant 0 : index
    %c0_8 = arith.constant 0 : index
    %c0_9 = arith.constant 0 : index
    %11 = vector.load %arg8[%c0_7, %c0_8, %c0_9] : memref<8x8x384xf32, #tpu.memory_space<vmem>>, vector<8x8x384xf32>
    tpu.vector_store %arg8[%c0_7, %c0_8, %c0_9], %10 {strides = array<i32>} : memref<8x8x384xf32, #tpu.memory_space<vmem>>, vector<8x8x384xf32>,
    %c0_10 = arith.constant 0 : index
    %c0_11 = arith.constant 0 : index
    %12 = vector.load %arg5[%c0_10, %c0_11] : memref<128x384xf32, #tpu.memory_space<vmem>>, vector<128x384xf32>
    %c0_12 = arith.constant 0 : index
    %c0_13 = arith.constant 0 : index
    %13 = vector.load %arg6[%c0_12, %c0_13] : memref<1x128xf32, #tpu.memory_space<vmem>>, vector<1x128xf32>
    %14 = vector.shape_cast %13 : vector<1x128xf32> to vector<1x128xf32>
    %15 = vector.broadcast %14 : vector<1x128xf32> to vector<8x128xf32>
    %c0_14 = arith.constant 0 : index
    %c0_15 = arith.constant 0 : index
    %16 = vector.load %arg9[%c0_14, %c0_15] : memref<8x128xf32, #tpu.memory_space<vmem>>, vector<8x128xf32>
    %c0_i32_16 = arith.constant 0 : i32
    %c2_i32 = arith.constant 2 : i32
    %17 = arith.muli %c0_i32_16, %c2_i32 : i32
    %18 = arith.index_cast %17 : i32 to index
    %c0_17 = arith.constant 0 : index
    %c0_18 = arith.constant 0 : index
    %19 = vector.load %arg8[%18, %c0_17, %c0_18] : memref<8x8x384xf32, #tpu.memory_space<vmem>>, vector<1x8x384xf32>
    %20 = vector.shape_cast %19 : vector<1x8x384xf32> to vector<8x384xf32>
    %cst_19 = arith.constant dense<0.000000e+00> : vector<8x384xf32>
    %21 = tpu.matmul %16, %12, %cst_19 {dimension_numbers = #tpu.dot_dimension_numbers<[1], [0], [0], [1], [0, 0, 1, 1], [], []>} : vector<8x128xf32>, vector<128x384xf32>, vector<8x384xf32> -> vector<8x384xf32>
    %22 = vector.extract_strided_slice %20 {offsets = [0, 0], sizes = [8, 256], strides = [1, 1]} : vector<8x384xf32> to vector<8x256xf32>
    %23 = vector.extract_strided_slice %21 {offsets = [0, 0], sizes = [8, 256], strides = [1, 1]} : vector<8x384xf32> to vector<8x256xf32>
    %24 = arith.addf %22, %23 : vector<8x256xf32>
    %25 = arith.negf %24 : vector<8x256xf32>
    %26 = math.exp %25 : vector<8x256xf32>
    %cst_20 = arith.constant 1.000000e+00 : f32
    %27 = vector.broadcast %cst_20 : f32 to vector<8x256xf32>
    %28 = arith.addf %27, %26 : vector<8x256xf32>
    %29 = arith.divf %27, %28 : vector<8x256xf32>
    %30 = vector.extract_strided_slice %29 {offsets = [0, 0], sizes = [8, 128], strides = [1, 1]} : vector<8x256xf32> to vector<8x128xf32>
    %31 = vector.extract_strided_slice %29 {offsets = [0, 128], sizes = [8, 128], strides = [1, 1]} : vector<8x256xf32> to vector<8x128xf32>
    %32 = vector.extract_strided_slice %20 {offsets = [0, 256], sizes = [8, 128], strides = [1, 1]} : vector<8x384xf32> to vector<8x128xf32>
    %33 = vector.extract_strided_slice %21 {offsets = [0, 256], sizes = [8, 128], strides = [1, 1]} : vector<8x384xf32> to vector<8x128xf32>
    %34 = arith.addf %33, %15 : vector<8x128xf32>
    %35 = arith.mulf %30, %34 : vector<8x128xf32>
    %36 = arith.addf %32, %35 : vector<8x128xf32>
    %37 = math.tanh %36 : vector<8x128xf32>
    %cst_21 = arith.constant 1.000000e+00 : f32
    %38 = vector.broadcast %cst_21 : f32 to vector<8x128xf32>
    %39 = arith.subf %38, %31 : vector<8x128xf32>
    %40 = arith.mulf %39, %37 : vector<8x128xf32>
    %41 = arith.mulf %31, %16 : vector<8x128xf32>
    %42 = arith.addf %40, %41 : vector<8x128xf32>
    %43 = arith.index_cast %c0_i32_16 : i32 to index
    %c0_22 = arith.constant 0 : index
    %c0_23 = arith.constant 0 : index
    %44 = vector.load %arg7[%43, %c0_22, %c0_23] : memref<4x8x128xf32, #tpu.memory_space<vmem>>, vector<1x8x128xf32>
    %45 = vector.shape_cast %44 : vector<1x8x128xf32> to vector<8x128xf32>
    %46 = vector.shape_cast %42 : vector<8x128xf32> to vector<1x8x128xf32>
    tpu.vector_store %arg7[%43, %c0_22, %c0_23], %46 {strides = array<i32>} : memref<4x8x128xf32, #tpu.memory_space<vmem>>, vector<1x8x128xf32>,
    %c1_i32 = arith.constant 1 : i32
    %47 = arith.addi %17, %c1_i32 : i32
    %48 = arith.index_cast %47 : i32 to index
    %c0_24 = arith.constant 0 : index
    %c0_25 = arith.constant 0 : index
    %49 = vector.load %arg8[%48, %c0_24, %c0_25] : memref<8x8x384xf32, #tpu.memory_space<vmem>>, vector<1x8x384xf32>
    %50 = vector.shape_cast %49 : vector<1x8x384xf32> to vector<8x384xf32>
    %cst_26 = arith.constant dense<0.000000e+00> : vector<8x384xf32>
    %51 = tpu.matmul %42, %12, %cst_26 {dimension_numbers = #tpu.dot_dimension_numbers<[1], [0], [0], [1], [0, 0, 1, 1], [], []>} : vector<8x128xf32>, vector<128x384xf32>, vector<8x384xf32> -> vector<8x384xf32>
    %52 = vector.extract_strided_slice %50 {offsets = [0, 0], sizes = [8, 256], strides = [1, 1]} : vector<8x384xf32> to vector<8x256xf32>
    %53 = vector.extract_strided_slice %51 {offsets = [0, 0], sizes = [8, 256], strides = [1, 1]} : vector<8x384xf32> to vector<8x256xf32>
    %54 = arith.addf %52, %53 : vector<8x256xf32>
    %55 = arith.negf %54 : vector<8x256xf32>
    %56 = math.exp %55 : vector<8x256xf32>
    %cst_27 = arith.constant 1.000000e+00 : f32
    %57 = vector.broadcast %cst_27 : f32 to vector<8x256xf32>
    %58 = arith.addf %57, %56 : vector<8x256xf32>
    %59 = arith.divf %57, %58 : vector<8x256xf32>
    %60 = vector.extract_strided_slice %59 {offsets = [0, 0], sizes = [8, 128], strides = [1, 1]} : vector<8x256xf32> to vector<8x128xf32>
    %61 = vector.extract_strided_slice %59 {offsets = [0, 128], sizes = [8, 128], strides = [1, 1]} : vector<8x256xf32> to vector<8x128xf32>
    %62 = vector.extract_strided_slice %50 {offsets = [0, 256], sizes = [8, 128], strides = [1, 1]} : vector<8x384xf32> to vector<8x128xf32>
    %63 = vector.extract_strided_slice %51 {offsets = [0, 256], sizes = [8, 128], strides = [1, 1]} : vector<8x384xf32> to vector<8x128xf32>
    %64 = arith.addf %63, %15 : vector<8x128xf32>
    %65 = arith.mulf %60, %64 : vector<8x128xf32>
    %66 = arith.addf %62, %65 : vector<8x128xf32>
    %67 = math.tanh %66 : vector<8x128xf32>
    %cst_28 = arith.constant 1.000000e+00 : f32
    %68 = vector.broadcast %cst_28 : f32 to vector<8x128xf32>
    %69 = arith.subf %68, %61 : vector<8x128xf32>
    %70 = arith.mulf %69, %67 : vector<8x128xf32>
    %71 = arith.mulf %61, %42 : vector<8x128xf32>
    %72 = arith.addf %70, %71 : vector<8x128xf32>
    %c1_i32_29 = arith.constant 1 : i32
    %c2_i32_30 = arith.constant 2 : i32
    %73 = arith.muli %c1_i32_29, %c2_i32_30 : i32
    %74 = arith.index_cast %73 : i32 to index
    %c0_31 = arith.constant 0 : index
    %c0_32 = arith.constant 0 : index
    %75 = vector.load %arg8[%74, %c0_31, %c0_32] : memref<8x8x384xf32, #tpu.memory_space<vmem>>, vector<1x8x384xf32>
    %76 = vector.shape_cast %75 : vector<1x8x384xf32> to vector<8x384xf32>
    %cst_33 = arith.constant dense<0.000000e+00> : vector<8x384xf32>
    %77 = tpu.matmul %72, %12, %cst_33 {dimension_numbers = #tpu.dot_dimension_numbers<[1], [0], [0], [1], [0, 0, 1, 1], [], []>} : vector<8x128xf32>, vector<128x384xf32>, vector<8x384xf32> -> vector<8x384xf32>
    %78 = vector.extract_strided_slice %76 {offsets = [0, 0], sizes = [8, 256], strides = [1, 1]} : vector<8x384xf32> to vector<8x256xf32>
    %79 = vector.extract_strided_slice %77 {offsets = [0, 0], sizes = [8, 256], strides = [1, 1]} : vector<8x384xf32> to vector<8x256xf32>
    %80 = arith.addf %78, %79 : vector<8x256xf32>
    %81 = arith.negf %80 : vector<8x256xf32>
    %82 = math.exp %81 : vector<8x256xf32>
    %cst_34 = arith.constant 1.000000e+00 : f32
    %83 = vector.broadcast %cst_34 : f32 to vector<8x256xf32>
    %84 = arith.addf %83, %82 : vector<8x256xf32>
    %85 = arith.divf %83, %84 : vector<8x256xf32>
    %86 = vector.extract_strided_slice %85 {offsets = [0, 0], sizes = [8, 128], strides = [1, 1]} : vector<8x256xf32> to vector<8x128xf32>
    %87 = vector.extract_strided_slice %85 {offsets = [0, 128], sizes = [8, 128], strides = [1, 1]} : vector<8x256xf32> to vector<8x128xf32>
    %88 = vector.extract_strided_slice %76 {offsets = [0, 256], sizes = [8, 128], strides = [1, 1]} : vector<8x384xf32> to vector<8x128xf32>
    %89 = vector.extract_strided_slice %77 {offsets = [0, 256], sizes = [8, 128], strides = [1, 1]} : vector<8x384xf32> to vector<8x128xf32>
    %90 = arith.addf %89, %15 : vector<8x128xf32>
    %91 = arith.mulf %86, %90 : vector<8x128xf32>
    %92 = arith.addf %88, %91 : vector<8x128xf32>
    %93 = math.tanh %92 : vector<8x128xf32>
    %cst_35 = arith.constant 1.000000e+00 : f32
    %94 = vector.broadcast %cst_35 : f32 to vector<8x128xf32>
    %95 = arith.subf %94, %87 : vector<8x128xf32>
    %96 = arith.mulf %95, %93 : vector<8x128xf32>
    %97 = arith.mulf %87, %72 : vector<8x128xf32>
    %98 = arith.addf %96, %97 : vector<8x128xf32>
    %99 = arith.index_cast %c1_i32_29 : i32 to index
    %c0_36 = arith.constant 0 : index
    %c0_37 = arith.constant 0 : index
    %100 = vector.load %arg7[%99, %c0_36, %c0_37] : memref<4x8x128xf32, #tpu.memory_space<vmem>>, vector<1x8x128xf32>
    %101 = vector.shape_cast %100 : vector<1x8x128xf32> to vector<8x128xf32>
    %102 = vector.shape_cast %98 : vector<8x128xf32> to vector<1x8x128xf32>
    tpu.vector_store %arg7[%99, %c0_36, %c0_37], %102 {strides = array<i32>} : memref<4x8x128xf32, #tpu.memory_space<vmem>>, vector<1x8x128xf32>,
    %c1_i32_38 = arith.constant 1 : i32
    %103 = arith.addi %73, %c1_i32_38 : i32
    %104 = arith.index_cast %103 : i32 to index
    %c0_39 = arith.constant 0 : index
    %c0_40 = arith.constant 0 : index
    %105 = vector.load %arg8[%104, %c0_39, %c0_40] : memref<8x8x384xf32, #tpu.memory_space<vmem>>, vector<1x8x384xf32>
    %106 = vector.shape_cast %105 : vector<1x8x384xf32> to vector<8x384xf32>
    %cst_41 = arith.constant dense<0.000000e+00> : vector<8x384xf32>
    %107 = tpu.matmul %98, %12, %cst_41 {dimension_numbers = #tpu.dot_dimension_numbers<[1], [0], [0], [1], [0, 0, 1, 1], [], []>} : vector<8x128xf32>, vector<128x384xf32>, vector<8x384xf32> -> vector<8x384xf32>
    %108 = vector.extract_strided_slice %106 {offsets = [0, 0], sizes = [8, 256], strides = [1, 1]} : vector<8x384xf32> to vector<8x256xf32>
    %109 = vector.extract_strided_slice %107 {offsets = [0, 0], sizes = [8, 256], strides = [1, 1]} : vector<8x384xf32> to vector<8x256xf32>
    %110 = arith.addf %108, %109 : vector<8x256xf32>
    %111 = arith.negf %110 : vector<8x256xf32>
    %112 = math.exp %111 : vector<8x256xf32>
    %cst_42 = arith.constant 1.000000e+00 : f32
    %113 = vector.broadcast %cst_42 : f32 to vector<8x256xf32>
    %114 = arith.addf %113, %112 : vector<8x256xf32>
    %115 = arith.divf %113, %114 : vector<8x256xf32>
    %116 = vector.extract_strided_slice %115 {offsets = [0, 0], sizes = [8, 128], strides = [1, 1]} : vector<8x256xf32> to vector<8x128xf32>
    %117 = vector.extract_strided_slice %115 {offsets = [0, 128], sizes = [8, 128], strides = [1, 1]} : vector<8x256xf32> to vector<8x128xf32>
    %118 = vector.extract_strided_slice %106 {offsets = [0, 256], sizes = [8, 128], strides = [1, 1]} : vector<8x384xf32> to vector<8x128xf32>
    %119 = vector.extract_strided_slice %107 {offsets = [0, 256], sizes = [8, 128], strides = [1, 1]} : vector<8x384xf32> to vector<8x128xf32>
    %120 = arith.addf %119, %15 : vector<8x128xf32>
    %121 = arith.mulf %116, %120 : vector<8x128xf32>
    %122 = arith.addf %118, %121 : vector<8x128xf32>
    %123 = math.tanh %122 : vector<8x128xf32>
    %cst_43 = arith.constant 1.000000e+00 : f32
    %124 = vector.broadcast %cst_43 : f32 to vector<8x128xf32>
    %125 = arith.subf %124, %117 : vector<8x128xf32>
    %126 = arith.mulf %125, %123 : vector<8x128xf32>
    %127 = arith.mulf %117, %98 : vector<8x128xf32>
    %128 = arith.addf %126, %127 : vector<8x128xf32>
    %c2_i32_44 = arith.constant 2 : i32
    %c2_i32_45 = arith.constant 2 : i32
    %129 = arith.muli %c2_i32_44, %c2_i32_45 : i32
    %130 = arith.index_cast %129 : i32 to index
    %c0_46 = arith.constant 0 : index
    %c0_47 = arith.constant 0 : index
    %131 = vector.load %arg8[%130, %c0_46, %c0_47] : memref<8x8x384xf32, #tpu.memory_space<vmem>>, vector<1x8x384xf32>
    %132 = vector.shape_cast %131 : vector<1x8x384xf32> to vector<8x384xf32>
    %cst_48 = arith.constant dense<0.000000e+00> : vector<8x384xf32>
    %133 = tpu.matmul %128, %12, %cst_48 {dimension_numbers = #tpu.dot_dimension_numbers<[1], [0], [0], [1], [0, 0, 1, 1], [], []>} : vector<8x128xf32>, vector<128x384xf32>, vector<8x384xf32> -> vector<8x384xf32>
    %134 = vector.extract_strided_slice %132 {offsets = [0, 0], sizes = [8, 256], strides = [1, 1]} : vector<8x384xf32> to vector<8x256xf32>
    %135 = vector.extract_strided_slice %133 {offsets = [0, 0], sizes = [8, 256], strides = [1, 1]} : vector<8x384xf32> to vector<8x256xf32>
    %136 = arith.addf %134, %135 : vector<8x256xf32>
    %137 = arith.negf %136 : vector<8x256xf32>
    %138 = math.exp %137 : vector<8x256xf32>
    %cst_49 = arith.constant 1.000000e+00 : f32
    %139 = vector.broadcast %cst_49 : f32 to vector<8x256xf32>
    %140 = arith.addf %139, %138 : vector<8x256xf32>
    %141 = arith.divf %139, %140 : vector<8x256xf32>
    %142 = vector.extract_strided_slice %141 {offsets = [0, 0], sizes = [8, 128], strides = [1, 1]} : vector<8x256xf32> to vector<8x128xf32>
    %143 = vector.extract_strided_slice %141 {offsets = [0, 128], sizes = [8, 128], strides = [1, 1]} : vector<8x256xf32> to vector<8x128xf32>
    %144 = vector.extract_strided_slice %132 {offsets = [0, 256], sizes = [8, 128], strides = [1, 1]} : vector<8x384xf32> to vector<8x128xf32>
    %145 = vector.extract_strided_slice %133 {offsets = [0, 256], sizes = [8, 128], strides = [1, 1]} : vector<8x384xf32> to vector<8x128xf32>
    %146 = arith.addf %145, %15 : vector<8x128xf32>
    %147 = arith.mulf %142, %146 : vector<8x128xf32>
    %148 = arith.addf %144, %147 : vector<8x128xf32>
    %149 = math.tanh %148 : vector<8x128xf32>
    %cst_50 = arith.constant 1.000000e+00 : f32
    %150 = vector.broadcast %cst_50 : f32 to vector<8x128xf32>
    %151 = arith.subf %150, %143 : vector<8x128xf32>
    %152 = arith.mulf %151, %149 : vector<8x128xf32>
    %153 = arith.mulf %143, %128 : vector<8x128xf32>
    %154 = arith.addf %152, %153 : vector<8x128xf32>
    %155 = arith.index_cast %c2_i32_44 : i32 to index
    %c0_51 = arith.constant 0 : index
    %c0_52 = arith.constant 0 : index
    %156 = vector.load %arg7[%155, %c0_51, %c0_52] : memref<4x8x128xf32, #tpu.memory_space<vmem>>, vector<1x8x128xf32>
    %157 = vector.shape_cast %156 : vector<1x8x128xf32> to vector<8x128xf32>
    %158 = vector.shape_cast %154 : vector<8x128xf32> to vector<1x8x128xf32>
    tpu.vector_store %arg7[%155, %c0_51, %c0_52], %158 {strides = array<i32>} : memref<4x8x128xf32, #tpu.memory_space<vmem>>, vector<1x8x128xf32>,
    %c1_i32_53 = arith.constant 1 : i32
    %159 = arith.addi %129, %c1_i32_53 : i32
    %160 = arith.index_cast %159 : i32 to index
    %c0_54 = arith.constant 0 : index
    %c0_55 = arith.constant 0 : index
    %161 = vector.load %arg8[%160, %c0_54, %c0_55] : memref<8x8x384xf32, #tpu.memory_space<vmem>>, vector<1x8x384xf32>
    %162 = vector.shape_cast %161 : vector<1x8x384xf32> to vector<8x384xf32>
    %cst_56 = arith.constant dense<0.000000e+00> : vector<8x384xf32>
    %163 = tpu.matmul %154, %12, %cst_56 {dimension_numbers = #tpu.dot_dimension_numbers<[1], [0], [0], [1], [0, 0, 1, 1], [], []>} : vector<8x128xf32>, vector<128x384xf32>, vector<8x384xf32> -> vector<8x384xf32>
    %164 = vector.extract_strided_slice %162 {offsets = [0, 0], sizes = [8, 256], strides = [1, 1]} : vector<8x384xf32> to vector<8x256xf32>
    %165 = vector.extract_strided_slice %163 {offsets = [0, 0], sizes = [8, 256], strides = [1, 1]} : vector<8x384xf32> to vector<8x256xf32>
    %166 = arith.addf %164, %165 : vector<8x256xf32>
    %167 = arith.negf %166 : vector<8x256xf32>
    %168 = math.exp %167 : vector<8x256xf32>
    %cst_57 = arith.constant 1.000000e+00 : f32
    %169 = vector.broadcast %cst_57 : f32 to vector<8x256xf32>
    %170 = arith.addf %169, %168 : vector<8x256xf32>
    %171 = arith.divf %169, %170 : vector<8x256xf32>
    %172 = vector.extract_strided_slice %171 {offsets = [0, 0], sizes = [8, 128], strides = [1, 1]} : vector<8x256xf32> to vector<8x128xf32>
    %173 = vector.extract_strided_slice %171 {offsets = [0, 128], sizes = [8, 128], strides = [1, 1]} : vector<8x256xf32> to vector<8x128xf32>
    %174 = vector.extract_strided_slice %162 {offsets = [0, 256], sizes = [8, 128], strides = [1, 1]} : vector<8x384xf32> to vector<8x128xf32>
    %175 = vector.extract_strided_slice %163 {offsets = [0, 256], sizes = [8, 128], strides = [1, 1]} : vector<8x384xf32> to vector<8x128xf32>
    %176 = arith.addf %175, %15 : vector<8x128xf32>
    %177 = arith.mulf %172, %176 : vector<8x128xf32>
    %178 = arith.addf %174, %177 : vector<8x128xf32>
    %179 = math.tanh %178 : vector<8x128xf32>
    %cst_58 = arith.constant 1.000000e+00 : f32
    %180 = vector.broadcast %cst_58 : f32 to vector<8x128xf32>
    %181 = arith.subf %180, %173 : vector<8x128xf32>
    %182 = arith.mulf %181, %179 : vector<8x128xf32>
    %183 = arith.mulf %173, %154 : vector<8x128xf32>
    %184 = arith.addf %182, %183 : vector<8x128xf32>
    %c3_i32 = arith.constant 3 : i32
    %c2_i32_59 = arith.constant 2 : i32
    %185 = arith.muli %c3_i32, %c2_i32_59 : i32
    %186 = arith.index_cast %185 : i32 to index
    %c0_60 = arith.constant 0 : index
    %c0_61 = arith.constant 0 : index
    %187 = vector.load %arg8[%186, %c0_60, %c0_61] : memref<8x8x384xf32, #tpu.memory_space<vmem>>, vector<1x8x384xf32>
    %188 = vector.shape_cast %187 : vector<1x8x384xf32> to vector<8x384xf32>
    %cst_62 = arith.constant dense<0.000000e+00> : vector<8x384xf32>
    %189 = tpu.matmul %184, %12, %cst_62 {dimension_numbers = #tpu.dot_dimension_numbers<[1], [0], [0], [1], [0, 0, 1, 1], [], []>} : vector<8x128xf32>, vector<128x384xf32>, vector<8x384xf32> -> vector<8x384xf32>
    %190 = vector.extract_strided_slice %188 {offsets = [0, 0], sizes = [8, 256], strides = [1, 1]} : vector<8x384xf32> to vector<8x256xf32>
    %191 = vector.extract_strided_slice %189 {offsets = [0, 0], sizes = [8, 256], strides = [1, 1]} : vector<8x384xf32> to vector<8x256xf32>
    %192 = arith.addf %190, %191 : vector<8x256xf32>
    %193 = arith.negf %192 : vector<8x256xf32>
    %194 = math.exp %193 : vector<8x256xf32>
    %cst_63 = arith.constant 1.000000e+00 : f32
    %195 = vector.broadcast %cst_63 : f32 to vector<8x256xf32>
    %196 = arith.addf %195, %194 : vector<8x256xf32>
    %197 = arith.divf %195, %196 : vector<8x256xf32>
    %198 = vector.extract_strided_slice %197 {offsets = [0, 0], sizes = [8, 128], strides = [1, 1]} : vector<8x256xf32> to vector<8x128xf32>
    %199 = vector.extract_strided_slice %197 {offsets = [0, 128], sizes = [8, 128], strides = [1, 1]} : vector<8x256xf32> to vector<8x128xf32>
    %200 = vector.extract_strided_slice %188 {offsets = [0, 256], sizes = [8, 128], strides = [1, 1]} : vector<8x384xf32> to vector<8x128xf32>
    %201 = vector.extract_strided_slice %189 {offsets = [0, 256], sizes = [8, 128], strides = [1, 1]} : vector<8x384xf32> to vector<8x128xf32>
    %202 = arith.addf %201, %15 : vector<8x128xf32>
    %203 = arith.mulf %198, %202 : vector<8x128xf32>
    %204 = arith.addf %200, %203 : vector<8x128xf32>
    %205 = math.tanh %204 : vector<8x128xf32>
    %cst_64 = arith.constant 1.000000e+00 : f32
    %206 = vector.broadcast %cst_64 : f32 to vector<8x128xf32>
    %207 = arith.subf %206, %199 : vector<8x128xf32>
    %208 = arith.mulf %207, %205 : vector<8x128xf32>
    %209 = arith.mulf %199, %184 : vector<8x128xf32>
    %210 = arith.addf %208, %209 : vector<8x128xf32>
    %211 = arith.index_cast %c3_i32 : i32 to index
    %c0_65 = arith.constant 0 : index
    %c0_66 = arith.constant 0 : index
    %212 = vector.load %arg7[%211, %c0_65, %c0_66] : memref<4x8x128xf32, #tpu.memory_space<vmem>>, vector<1x8x128xf32>
    %213 = vector.shape_cast %212 : vector<1x8x128xf32> to vector<8x128xf32>
    %214 = vector.shape_cast %210 : vector<8x128xf32> to vector<1x8x128xf32>
    tpu.vector_store %arg7[%211, %c0_65, %c0_66], %214 {strides = array<i32>} : memref<4x8x128xf32, #tpu.memory_space<vmem>>, vector<1x8x128xf32>,
    %c1_i32_67 = arith.constant 1 : i32
    %215 = arith.addi %185, %c1_i32_67 : i32
    %216 = arith.index_cast %215 : i32 to index
    %c0_68 = arith.constant 0 : index
    %c0_69 = arith.constant 0 : index
    %217 = vector.load %arg8[%216, %c0_68, %c0_69] : memref<8x8x384xf32, #tpu.memory_space<vmem>>, vector<1x8x384xf32>
    %218 = vector.shape_cast %217 : vector<1x8x384xf32> to vector<8x384xf32>
    %cst_70 = arith.constant dense<0.000000e+00> : vector<8x384xf32>
    %219 = tpu.matmul %210, %12, %cst_70 {dimension_numbers = #tpu.dot_dimension_numbers<[1], [0], [0], [1], [0, 0, 1, 1], [], []>} : vector<8x128xf32>, vector<128x384xf32>, vector<8x384xf32> -> vector<8x384xf32>
    %220 = vector.extract_strided_slice %218 {offsets = [0, 0], sizes = [8, 256], strides = [1, 1]} : vector<8x384xf32> to vector<8x256xf32>
    %221 = vector.extract_strided_slice %219 {offsets = [0, 0], sizes = [8, 256], strides = [1, 1]} : vector<8x384xf32> to vector<8x256xf32>
    %222 = arith.addf %220, %221 : vector<8x256xf32>
    %223 = arith.negf %222 : vector<8x256xf32>
    %224 = math.exp %223 : vector<8x256xf32>
    %cst_71 = arith.constant 1.000000e+00 : f32
    %225 = vector.broadcast %cst_71 : f32 to vector<8x256xf32>
    %226 = arith.addf %225, %224 : vector<8x256xf32>
    %227 = arith.divf %225, %226 : vector<8x256xf32>
    %228 = vector.extract_strided_slice %227 {offsets = [0, 0], sizes = [8, 128], strides = [1, 1]} : vector<8x256xf32> to vector<8x128xf32>
    %229 = vector.extract_strided_slice %227 {offsets = [0, 128], sizes = [8, 128], strides = [1, 1]} : vector<8x256xf32> to vector<8x128xf32>
    %230 = vector.extract_strided_slice %218 {offsets = [0, 256], sizes = [8, 128], strides = [1, 1]} : vector<8x384xf32> to vector<8x128xf32>
    %231 = vector.extract_strided_slice %219 {offsets = [0, 256], sizes = [8, 128], strides = [1, 1]} : vector<8x384xf32> to vector<8x128xf32>
    %232 = arith.addf %231, %15 : vector<8x128xf32>
    %233 = arith.mulf %228, %232 : vector<8x128xf32>
    %234 = arith.addf %230, %233 : vector<8x128xf32>
    %235 = math.tanh %234 : vector<8x128xf32>
    %cst_72 = arith.constant 1.000000e+00 : f32
    %236 = vector.broadcast %cst_72 : f32 to vector<8x128xf32>
    %237 = arith.subf %236, %229 : vector<8x128xf32>
    %238 = arith.mulf %237, %235 : vector<8x128xf32>
    %239 = arith.mulf %229, %210 : vector<8x128xf32>
    %240 = arith.addf %238, %239 : vector<8x128xf32>
    %c4_i32 = arith.constant 4 : i32
    %c0_73 = arith.constant 0 : index
    %c0_74 = arith.constant 0 : index
    %241 = vector.load %arg9[%c0_73, %c0_74] : memref<8x128xf32, #tpu.memory_space<vmem>>, vector<8x128xf32>
    tpu.vector_store %arg9[%c0_73, %c0_74], %240 {strides = array<i32>} : memref<8x128xf32, #tpu.memory_space<vmem>>, vector<8x128xf32>,
    return
  }
  func.func @transform_0(%arg0: i32, %arg1: i32) -> (i32, i32, i32) {
    %c0_i32 = arith.constant 0 : i32
    %c0_i32_0 = arith.constant 0 : i32
    return %arg1, %arg0, %c0_i32 : i32, i32, i32
  }
  func.func @transform_1(%arg0: i32, %arg1: i32) -> (i32, i32) {
    %c0_i32 = arith.constant 0 : i32
    %c0_i32_0 = arith.constant 0 : i32
    %c0_i32_1 = arith.constant 0 : i32
    return %c0_i32, %c0_i32_0 : i32, i32
  }
  func.func @transform_2(%arg0: i32, %arg1: i32) -> (i32, i32) {
    %c0_i32 = arith.constant 0 : i32
    %c0_i32_0 = arith.constant 0 : i32
    %c0_i32_1 = arith.constant 0 : i32
    return %c0_i32, %c0_i32_0 : i32, i32
  }
  func.func @transform_3(%arg0: i32, %arg1: i32) -> (i32, i32) {
    %c0_i32 = arith.constant 0 : i32
    %c0_i32_0 = arith.constant 0 : i32
    %c0_i32_1 = arith.constant 0 : i32
    return %c0_i32, %c0_i32_0 : i32, i32
  }
  func.func @transform_4(%arg0: i32, %arg1: i32) -> (i32, i32) {
    %c0_i32 = arith.constant 0 : i32
    %c0_i32_0 = arith.constant 0 : i32
    %c0_i32_1 = arith.constant 0 : i32
    return %c0_i32, %c0_i32_0 : i32, i32
  }
  func.func @transform_5(%arg0: i32, %arg1: i32) -> (i32, i32, i32) {
    %c0_i32 = arith.constant 0 : i32
    %c0_i32_0 = arith.constant 0 : i32
    return %arg1, %arg0, %c0_i32 : i32, i32, i32
  }
}

</mosaic_0001>

<llo_original>
// kernel: tpu_custom_call.1
$region0: #{tpu_custom_call.1}
  #allocation0 [shape = 'u32[]', space=smem, size = 0x4, offset = 0x4, fixed_abs, tag = 'smem constant byte address 0x4 - core index']
  #allocation1 [shape = 'u32[144,128]{1,0:T(1,128)}', space=vmem, size = 0x12000, scoped, tag = 'internal scratch']
  #allocation2 [shape = 'f32[8,8,384]{2,1,0:T(8,128)}', space=vmem, size = 0x18000, scoped, tag = 'scratch operand']
  #allocation3 [shape = 'f32[8,128]{1,0:T(8,128)}', space=vmem, size = 0x1000, scoped, tag = 'scratch operand']
  %s0 = inlined_call_operand.hbm [shape: f32[8,8,8], index: 0, kind: input, shape index: {}]
  %s1 = inlined_call_operand.hbm [shape: f32[8,384], index: 1, kind: input, shape index: {}]
  %s2 = inlined_call_operand.vmem [shape: f32[1,384], index: 2, kind: input, shape index: {}]
  %s3 = inlined_call_operand.hbm [shape: f32[128,384], index: 3, kind: input, shape index: {}]
  %s4 = inlined_call_operand.vmem [shape: f32[1,128], index: 4, kind: input, shape index: {}]
  %s5 = inlined_call_operand.hbm [shape: f32[4,8,128], index: 5, kind: output, shape index: {}]
  %s6 = sld [smem:[#allocation0]]
  $region46: #{tpu_custom_call.1} parent=0
    _
  %s8 = ssub.s32 1, %s6
  %s9 = scalar_select 0, %s8, %s6
  $region1: #{tpu_custom_call.1} parent=0
    #allocation4 [shape = 'u8[32768]{0}', space=vmem, size = 0x8000, scoped, tag = 'input window, operand 0, single buffered']
    #allocation5 [shape = 's32[1]{0}', space=sflag, size = 0x4, scoped, tag = 'scoped memory for tpu_custom_call.1']
    #allocation6 [shape = 's32[1]{0}', space=sflag, size = 0x4, scoped, tag = 'scoped memory for tpu_custom_call.1']
    #allocation7 [shape = 'u8[12288]{0}', space=vmem, size = 0x3000, scoped, tag = 'input window, operand 1, single buffered']
    #allocation8 [shape = 's32[1]{0}', space=sflag, size = 0x4, scoped, tag = 'scoped memory for tpu_custom_call.1']
    #allocation9 [shape = 'u8[196608]{0}', space=vmem, size = 0x30000, scoped, tag = 'input window, operand 3, single buffered']
    #allocation10 [shape = 'u8[16384]{0}', space=vmem, size = 0x4000, scoped, tag = 'output window, operand 0, single buffered']
    %10 = vsyncpa [#allocation5], 0
    %11 = vsyncpa [#allocation8], 0
    %12 = vsyncpa [#allocation6], 0
    // Predicated region
    $region2: #{tpu_custom_call.1} parent=1 // pred_check
      _
    $region3: #{tpu_custom_call.1} parent=1 // pred_check_branch
      %14 = sbr.rel (0) target = $region5
    $region4: #{tpu_custom_call.1} parent=1 // pred_region
      %s16 = ssub.s32 1024, 1024
      %17 = vsyncadd [#allocation5], %s16
      %s18 = sshll.u32 [#allocation4], 4
      %s19 = int_to_ptr.vmem [resolvable:$true] %s18
      %24 = dma.hbm_to_vmem [thread:$0]  %s0, 1024, %s19, [#allocation5], 128, 128, 8
    $region5: #{tpu_custom_call.1} parent=1 // pred_fallthru
      _
    // Predicated region
    $region6: #{tpu_custom_call.1} parent=1 // pred_check
      _
    $region7: #{tpu_custom_call.1} parent=1 // pred_check_branch
      %26 = sbr.rel (0) target = $region9
    $region8: #{tpu_custom_call.1} parent=1 // pred_region
      %s28 = ssub.s32 384, 384
      %29 = vsyncadd [#allocation8], %s28
      %s31 = sshll.u32 [#allocation7], 4
      %s32 = int_to_ptr.vmem [resolvable:$true] %s31
      %34 = dma.hbm_to_vmem [thread:$0]  %s1, 384, %s32, [#allocation8]
    $region9: #{tpu_custom_call.1} parent=1 // pred_fallthru
      _
    // Predicated region
    $region10: #{tpu_custom_call.1} parent=1 // pred_check
      _
    $region11: #{tpu_custom_call.1} parent=1 // pred_check_branch
      %36 = sbr.rel (0) target = $region13
    $region12: #{tpu_custom_call.1} parent=1 // pred_region
      _
    $region13: #{tpu_custom_call.1} parent=1 // pred_fallthru
      _
    // Predicated region
    $region14: #{tpu_custom_call.1} parent=1 // pred_check
      _
    $region15: #{tpu_custom_call.1} parent=1 // pred_check_branch
      %38 = sbr.rel (0) target = $region17
    $region16: #{tpu_custom_call.1} parent=1 // pred_region
      %s40 = ssub.s32 6144, 6144
      %41 = vsyncadd [#allocation8], %s40
      %s42 = sshll.u32 [#allocation9], 4
      %s43 = int_to_ptr.vmem [resolvable:$true] %s42
      %48 = dma.hbm_to_vmem [thread:$0]  %s3, 6144, %s43, [#allocation8], 384, 384, 24
    $region17: #{tpu_custom_call.1} parent=1 // pred_fallthru
      _
    // Predicated region
    $region18: #{tpu_custom_call.1} parent=1 // pred_check
      _
    $region19: #{tpu_custom_call.1} parent=1 // pred_check_branch
      %50 = sbr.rel (0) target = $region21
    $region20: #{tpu_custom_call.1} parent=1 // pred_region
      _
    $region21: #{tpu_custom_call.1} parent=1 // pred_fallthru
      _
    // Predicated region
    $region22: #{tpu_custom_call.1} parent=1 // pred_check
      _
    $region23: #{tpu_custom_call.1} parent=1 // pred_check_branch
      %52 = sbr.rel (0) target = $region25
    $region24: #{tpu_custom_call.1} parent=1 // pred_region
      %53 = dma.done [#allocation5], 1024
    $region25: #{tpu_custom_call.1} parent=1 // pred_fallthru
      _
    // Predicated region
    $region26: #{tpu_custom_call.1} parent=1 // pred_check
      _
    $region27: #{tpu_custom_call.1} parent=1 // pred_check_branch
      %55 = sbr.rel (0) target = $region29
    $region28: #{tpu_custom_call.1} parent=1 // pred_region
      %56 = dma.done [#allocation8], 384
    $region29: #{tpu_custom_call.1} parent=1 // pred_fallthru
      _
    // Predicated region
    $region30: #{tpu_custom_call.1} parent=1 // pred_check
      _
    $region31: #{tpu_custom_call.1} parent=1 // pred_check_branch
      %58 = sbr.rel (0) target = $region33
    $region32: #{tpu_custom_call.1} parent=1 // pred_region
      %59 = dma.done [#allocation8], 6144
    $region33: #{tpu_custom_call.1} parent=1 // pred_fallthru
      _
    %p60 = scmp.eq.s32.totalorder 0, 0
    // Predicated region
    $region34: #{tpu_custom_call.1} parent=1 // pred_check
      %p61 = pneg %p60
    $region35: #{tpu_custom_call.1} parent=1 // pred_check_branch
      %63 = sbr.rel (%p61) target = $region37
    $region36: #{tpu_custom_call.1} parent=1 // pred_region
      %64 = vst [vmem:[#allocation3] sm:$0xff] 0.0
    $region37: #{tpu_custom_call.1} parent=1 // pred_fallthru
      _
    %v65 = vld [vmem:[#allocation4] sm:$0xff]
    %v66 = vld [vmem:[#allocation4 + $0x8] sm:$0xff]
    %v67 = vld [vmem:[#allocation4 + $0x10] sm:$0xff]
    %v68 = vld [vmem:[#allocation4 + $0x18] sm:$0xff]
    %v69 = vld [vmem:[#allocation4 + $0x20] sm:$0xff]
    %v70 = vld [vmem:[#allocation4 + $0x28] sm:$0xff]
    %v71 = vld [vmem:[#allocation4 + $0x30] sm:$0xff]
    %v72 = vld [vmem:[#allocation4 + $0x38] sm:$0xff]
    %v73 = vld [vmem:[#allocation7] sm:$0xff]
    %v74 = vld [vmem:[#allocation7 + $0x8] sm:$0xff]
    %v75 = vld [vmem:[#allocation7 + $0x10] sm:$0xff]
    %v76 = vld [vmem:[%s2] sm:$0x7]
    %v78 = vlaneseq
    %v79 = vshrl.u32 %v78, 7
    %v80 = vsub.s32 0, %v79
    %v81 = vrot.slane %v76, %v80
    %v82 = vlaneseq
    %v83 = vshrl.u32 %v82, 7
    %v84 = vsub.s32 1, %v83
    %v85 = vrot.slane %v76, %v84
    %v86 = vlaneseq
    %v87 = vshrl.u32 %v86, 7
    %v88 = vsub.s32 2, %v87
    %v89 = vrot.slane %v76, %v88
    %vm93 = vcmask 64512
    %v95 = vsel %vm93, %v65, 0
    %v98 = vsel %vm93, %v66, 0
    %v101 = vsel %vm93, %v67, 0
    %v104 = vsel %vm93, %v68, 0
    %v107 = vsel %vm93, %v69, 0
    %v110 = vsel %vm93, %v70, 0
    %v113 = vsel %vm93, %v71, 0
    %v116 = vsel %vm93, %v72, 0
    %118 = vmatprep.subr.mxu0 0.0
    %119 = vmatpush1.msra.mxu0 0.0
    %120 = vmatprep.subr.mxu0 0.0
    %121 = vmatpush1.msra.mxu0 0.0
    %122 = vmatprep.subr.mxu0 0.0
    %123 = vmatpush1.msra.mxu0 0.0
    %124 = vmatprep.subr.mxu0 0.0
    %125 = vmatpush1.msra.mxu0 0.0
    %126 = vmatprep.subr.mxu0 0.0
    %127 = vmatpush1.msra.mxu0 0.0
    %128 = vmatprep.subr.mxu0 0.0
    %129 = vmatpush1.msra.mxu0 0.0
    %130 = vmatprep.subr.mxu0 0.0
    %131 = vmatpush1.msra.mxu0 0.0
    %132 = vmatprep.subr.mxu0 0.0
    %133 = vmatpush1.msra.mxu0 0.0
    %134 = vmatprep.subr.mxu0 0.0
    %135 = vmatpush1.msra.mxu0 0.0
    %136 = vmatprep.subr.mxu0 0.0
    %137 = vmatpush1.msra.mxu0 0.0
    %138 = vmatprep.subr.mxu0 0.0
    %139 = vmatpush1.msra.mxu0 0.0
    %140 = vmatprep.subr.mxu0 0.0
    %141 = vmatpush1.msra.mxu0 0.0
    %142 = vmatprep.subr.mxu0 0.0
    %143 = vmatpush1.msra.mxu0 0.0
    %144 = vmatprep.subr.mxu0 0.0
    %145 = vmatpush1.msra.mxu0 0.0
    %146 = vmatprep.subr.mxu0 0.0
    %147 = vmatpush1.msra.mxu0 0.0
    %148 = vmatprep.subr.mxu0 %v74
    %149 = vmatpush1.msra.mxu0 %v73
    %150 = vmatprep.subr.mxu0 0.0
    %151 = vmatpush2.msra.mxu0 0.0
    %152 = vmatprep.subr.mxu0 0.0
    %153 = vmatpush2.msra.mxu0 0.0
    %154 = vmatprep.subr.mxu0 0.0
    %155 = vmatpush2.msra.mxu0 0.0
    %156 = vmatprep.subr.mxu0 0.0
    %157 = vmatpush2.msra.mxu0 0.0
    %158 = vmatprep.subr.mxu0 0.0
    %159 = vmatpush2.msra.mxu0 0.0
    %160 = vmatprep.subr.mxu0 0.0
    %161 = vmatpush2.msra.mxu0 0.0
    %162 = vmatprep.subr.mxu0 0.0
    %163 = vmatpush2.msra.mxu0 0.0
    %164 = vmatprep.subr.mxu0 0.0
    %165 = vmatpush2.msra.mxu0 0.0
    %166 = vmatprep.subr.mxu0 0.0
    %167 = vmatpush2.msra.mxu0 0.0
    %168 = vmatprep.subr.mxu0 0.0
    %169 = vmatpush2.msra.mxu0 0.0
    %170 = vmatprep.subr.mxu0 0.0
    %171 = vmatpush2.msra.mxu0 0.0
    %172 = vmatprep.subr.mxu0 0.0
    %173 = vmatpush2.msra.mxu0 0.0
    %174 = vmatprep.subr.mxu0 0.0
    %175 = vmatpush2.msra.mxu0 0.0
    %176 = vmatprep.subr.mxu0 0.0
    %177 = vmatpush2.msra.mxu0 0.0
    %178 = vmatprep.subr.mxu0 0.0
    %179 = vmatpush2.msra.mxu0 0.0
    %180 = vmatprep.subr.mxu0 0.0
    %181 = vmatpush2.msra.mxu0 0.0
    %182 = vmatprep.mubr.f32.mxu0 0.0
    %183 = vmatmul.mubr.f32.gmra.mxu0 %v95
    %v184 = vpop.f32.mrf.mxu0
    %v185 = vadd.f32 %v81, %v184
    %v186 = vpop.f32.mrf.mxu0
    %v187 = vadd.f32 %v85, %v186
    %188 = vmatprep.mubr.f32.mxu0 0.0
    %189 = vmatmul.mubr.f32.gmra.mxu0 %v98
    %v190 = vpop.f32.mrf.mxu0
    %v191 = vadd.f32 %v81, %v190
    %v192 = vpop.f32.mrf.mxu0
    %v193 = vadd.f32 %v85, %v192
    %194 = vmatprep.mubr.f32.mxu0 0.0
    %195 = vmatmul.mubr.f32.gmra.mxu0 %v101
    %v196 = vpop.f32.mrf.mxu0
    %v197 = vadd.f32 %v81, %v196
    %v198 = vpop.f32.mrf.mxu0
    %v199 = vadd.f32 %v85, %v198
    %200 = vmatprep.mubr.f32.mxu0 0.0
    %201 = vmatmul.mubr.f32.gmra.mxu0 %v104
    %v202 = vpop.f32.mrf.mxu0
    %v203 = vadd.f32 %v81, %v202
    %v204 = vpop.f32.mrf.mxu0
    %v205 = vadd.f32 %v85, %v204
    %206 = vmatprep.mubr.f32.mxu0 0.0
    %207 = vmatmul.mubr.f32.gmra.mxu0 %v107
    %v208 = vpop.f32.mrf.mxu0
    %v209 = vadd.f32 %v81, %v208
    %v210 = vpop.f32.mrf.mxu0
    %v211 = vadd.f32 %v85, %v210
    %212 = vmatprep.mubr.f32.mxu0 0.0
    %213 = vmatmul.mubr.f32.gmra.mxu0 %v110
    %v214 = vpop.f32.mrf.mxu0
    %v215 = vadd.f32 %v81, %v214
    %v216 = vpop.f32.mrf.mxu0
    %v217 = vadd.f32 %v85, %v216
    %218 = vmatprep.mubr.f32.mxu0 0.0
    %219 = vmatmul.mubr.f32.gmra.mxu0 %v113
    %v220 = vpop.f32.mrf.mxu0
    %v221 = vadd.f32 %v81, %v220
    %v222 = vpop.f32.mrf.mxu0
    %v223 = vadd.f32 %v85, %v222
    %224 = vmatprep.mubr.f32.mxu0 0.0
    %225 = vmatmul.mubr.f32.gmra.mxu0 %v116
    %v226 = vpop.f32.mrf.mxu0
    %v227 = vadd.f32 %v81, %v226
    %v228 = vpop.f32.mrf.mxu0
    %v229 = vadd.f32 %v85, %v228
    %230 = vdwg.mxu0
    %231 = vmatprep.subr.mxu0 0.0
    %232 = vmatpush1.msra.mxu0 0.0
    %233 = vmatprep.subr.mxu0 0.0
    %234 = vmatpush1.msra.mxu0 0.0
    %235 = vmatprep.subr.mxu0 0.0
    %236 = vmatpush1.msra.mxu0 0.0
    %237 = vmatprep.subr.mxu0 0.0
    %238 = vmatpush1.msra.mxu0 0.0
    %239 = vmatprep.subr.mxu0 0.0
    %240 = vmatpush1.msra.mxu0 0.0
    %241 = vmatprep.subr.mxu0 0.0
    %242 = vmatpush1.msra.mxu0 0.0
    %243 = vmatprep.subr.mxu0 0.0
    %244 = vmatpush1.msra.mxu0 0.0
    %245 = vmatprep.subr.mxu0 0.0
    %246 = vmatpush1.msra.mxu0 0.0
    %247 = vmatprep.subr.mxu0 0.0
    %248 = vmatpush1.msra.mxu0 0.0
    %249 = vmatprep.subr.mxu0 0.0
    %250 = vmatpush1.msra.mxu0 0.0
    %251 = vmatprep.subr.mxu0 0.0
    %252 = vmatpush1.msra.mxu0 0.0
    %253 = vmatprep.subr.mxu0 0.0
    %254 = vmatpush1.msra.mxu0 0.0
    %255 = vmatprep.subr.mxu0 0.0
    %256 = vmatpush1.msra.mxu0 0.0
    %257 = vmatprep.subr.mxu0 0.0
    %258 = vmatpush1.msra.mxu0 0.0
    %259 = vmatprep.subr.mxu0 0.0
    %260 = vmatpush1.msra.mxu0 0.0
    %261 = vmatprep.subr.mxu0 0.0
    %262 = vmatpush1.msra.mxu0 %v75
    %263 = vmatprep.subr.mxu0 0.0
    %264 = vmatpush2.msra.mxu0 0.0
    %265 = vmatprep.subr.mxu0 0.0
    %266 = vmatpush2.msra.mxu0 0.0
    %267 = vmatprep.subr.mxu0 0.0
    %268 = vmatpush2.msra.mxu0 0.0
    %269 = vmatprep.subr.mxu0 0.0
    %270 = vmatpush2.msra.mxu0 0.0
    %271 = vmatprep.subr.mxu0 0.0
    %272 = vmatpush2.msra.mxu0 0.0
    %273 = vmatprep.subr.mxu0 0.0
    %274 = vmatpush2.msra.mxu0 0.0
    %275 = vmatprep.subr.mxu0 0.0
    %276 = vmatpush2.msra.mxu0 0.0
    %277 = vmatprep.subr.mxu0 0.0
    %278 = vmatpush2.msra.mxu0 0.0
    %279 = vmatprep.subr.mxu0 0.0
    %280 = vmatpush2.msra.mxu0 0.0
    %281 = vmatprep.subr.mxu0 0.0
    %282 = vmatpush2.msra.mxu0 0.0
    %283 = vmatprep.subr.mxu0 0.0
    %284 = vmatpush2.msra.mxu0 0.0
    %285 = vmatprep.subr.mxu0 0.0
    %286 = vmatpush2.msra.mxu0 0.0
    %287 = vmatprep.subr.mxu0 0.0
    %288 = vmatpush2.msra.mxu0 0.0
    %289 = vmatprep.subr.mxu0 0.0
    %290 = vmatpush2.msra.mxu0 0.0
    %291 = vmatprep.subr.mxu0 0.0
    %292 = vmatpush2.msra.mxu0 0.0
    %293 = vmatprep.subr.mxu0 0.0
    %294 = vmatpush2.msra.mxu0 0.0
    %295 = vmatprep.mubr.f32.mxu0 0.0
    %296 = vmatmul.mubr.f32.gmra.mxu0 %v95
    %v297 = vpop.f32.mrf.mxu0
    %v298 = vadd.f32 %v89, %v297
    %v299 = vpop.f32.mrf.mxu0
    %300 = vmatprep.mubr.f32.mxu0 0.0
    %301 = vmatmul.mubr.f32.gmra.mxu0 %v98
    %v302 = vpop.f32.mrf.mxu0
    %v303 = vadd.f32 %v89, %v302
    %v304 = vpop.f32.mrf.mxu0
    %305 = vmatprep.mubr.f32.mxu0 0.0
    %306 = vmatmul.mubr.f32.gmra.mxu0 %v101
    %v307 = vpop.f32.mrf.mxu0
    %v308 = vadd.f32 %v89, %v307
    %v309 = vpop.f32.mrf.mxu0
    %310 = vmatprep.mubr.f32.mxu0 0.0
    %311 = vmatmul.mubr.f32.gmra.mxu0 %v104
    %v312 = vpop.f32.mrf.mxu0
    %v313 = vadd.f32 %v89, %v312
    %v314 = vpop.f32.mrf.mxu0
    %315 = vmatprep.mubr.f32.mxu0 0.0
    %316 = vmatmul.mubr.f32.gmra.mxu0 %v107
    %v317 = vpop.f32.mrf.mxu0
    %v318 = vadd.f32 %v89, %v317
    %v319 = vpop.f32.mrf.mxu0
    %320 = vmatprep.mubr.f32.mxu0 0.0
    %321 = vmatmul.mubr.f32.gmra.mxu0 %v110
    %v322 = vpop.f32.mrf.mxu0
    %v323 = vadd.f32 %v89, %v322
    %v324 = vpop.f32.mrf.mxu0
    %325 = vmatprep.mubr.f32.mxu0 0.0
    %326 = vmatmul.mubr.f32.gmra.mxu0 %v113
    %v327 = vpop.f32.mrf.mxu0
    %v328 = vadd.f32 %v89, %v327
    %v329 = vpop.f32.mrf.mxu0
    %330 = vmatprep.mubr.f32.mxu0 0.0
    %331 = vmatmul.mubr.f32.gmra.mxu0 %v116
    %v332 = vpop.f32.mrf.mxu0
    %v333 = vadd.f32 %v89, %v332
    %v334 = vpop.f32.mrf.mxu0
    %335 = vdwg.mxu0
    %336 = vst [vmem:[#allocation2] sm:$0xff] %v185
    %337 = vst [vmem:[#allocation2 + $0x8] sm:$0xff] %v187
    %338 = vst [vmem:[#allocation2 + $0x10] sm:$0xff] %v298
    %339 = vst [vmem:[#allocation2 + $0x18] sm:$0xff] %v191
    %340 = vst [vmem:[#allocation2 + $0x20] sm:$0xff] %v193
    %341 = vst [vmem:[#allocation2 + $0x28] sm:$0xff] %v303
    %342 = vst [vmem:[#allocation2 + $0x30] sm:$0xff] %v197
    %343 = vst [vmem:[#allocation2 + $0x38] sm:$0xff] %v199
    %344 = vst [vmem:[#allocation2 + $0x40] sm:$0xff] %v308
    %345 = vst [vmem:[#allocation2 + $0x48] sm:$0xff] %v203
    %346 = vst [vmem:[#allocation2 + $0x50] sm:$0xff] %v205
    %347 = vst [vmem:[#allocation2 + $0x58] sm:$0xff] %v313
    %348 = vst [vmem:[#allocation2 + $0x60] sm:$0xff] %v209
    %349 = vst [vmem:[#allocation2 + $0x68] sm:$0xff] %v211
    %350 = vst [vmem:[#allocation2 + $0x70] sm:$0xff] %v318
    %351 = vst [vmem:[#allocation2 + $0x78] sm:$0xff] %v215
    %352 = vst [vmem:[#allocation2 + $0x80] sm:$0xff] %v217
    %353 = vst [vmem:[#allocation2 + $0x88] sm:$0xff] %v323
    %354 = vst [vmem:[#allocation2 + $0x90] sm:$0xff] %v221
    %355 = vst [vmem:[#allocation2 + $0x98] sm:$0xff] %v223
    %356 = vst [vmem:[#allocation2 + $0xa0] sm:$0xff] %v328
    %357 = vst [vmem:[#allocation2 + $0xa8] sm:$0xff] %v227
    %358 = vst [vmem:[#allocation2 + $0xb0] sm:$0xff] %v229
    %359 = vst [vmem:[#allocation2 + $0xb8] sm:$0xff] %v333
    %v360 = vld [vmem:[#allocation9] sm:$0xff]
    %v361 = vld [vmem:[#allocation9 + $0x8] sm:$0xff]
    %v362 = vld [vmem:[#allocation9 + $0x10] sm:$0xff]
    %v363 = vld [vmem:[#allocation9 + $0x18] sm:$0xff]
    %v364 = vld [vmem:[#allocation9 + $0x20] sm:$0xff]
    %v365 = vld [vmem:[#allocation9 + $0x28] sm:$0xff]
    %v366 = vld [vmem:[#allocation9 + $0x30] sm:$0xff]
    %v367 = vld [vmem:[#allocation9 + $0x38] sm:$0xff]
    %v368 = vld [vmem:[#allocation9 + $0x40] sm:$0xff]
    %v369 = vld [vmem:[#allocation9 + $0x48] sm:$0xff]
    %v370 = vld [vmem:[#allocation9 + $0x50] sm:$0xff]
    %v371 = vld [vmem:[#allocation9 + $0x58] sm:$0xff]
    %v372 = vld [vmem:[#allocation9 + $0x60] sm:$0xff]
    %v373 = vld [vmem:[#allocation9 + $0x68] sm:$0xff]
    %v374 = vld [vmem:[#allocation9 + $0x70] sm:$0xff]
    %v375 = vld [vmem:[#allocation9 + $0x78] sm:$0xff]
    %v376 = vld [vmem:[#allocation9 + $0x80] sm:$0xff]
    %v377 = vld [vmem:[#allocation9 + $0x88] sm:$0xff]
    %v378 = vld [vmem:[#allocation9 + $0x90] sm:$0xff]
    %v379 = vld [vmem:[#allocation9 + $0x98] sm:$0xff]
    %v380 = vld [vmem:[#allocation9 + $0xa0] sm:$0xff]
    %v381 = vld [vmem:[#allocation9 + $0xa8] sm:$0xff]
    %v382 = vld [vmem:[#allocation9 + $0xb0] sm:$0xff]
    %v383 = vld [vmem:[#allocation9 + $0xb8] sm:$0xff]
    %v384 = vld [vmem:[#allocation9 + $0xc0] sm:$0xff]
    %v385 = vld [vmem:[#allocation9 + $0xc8] sm:$0xff]
    %v386 = vld [vmem:[#allocation9 + $0xd0] sm:$0xff]
    %v387 = vld [vmem:[#allocation9 + $0xd8] sm:$0xff]
    %v388 = vld [vmem:[#allocation9 + $0xe0] sm:$0xff]
    %v389 = vld [vmem:[#allocation9 + $0xe8] sm:$0xff]
    %v390 = vld [vmem:[#allocation9 + $0xf0] sm:$0xff]
    %v391 = vld [vmem:[#allocation9 + $0xf8] sm:$0xff]
    %v392 = vld [vmem:[#allocation9 + $0x100] sm:$0xff]
    %v393 = vld [vmem:[#allocation9 + $0x108] sm:$0xff]
    %v394 = vld [vmem:[#allocation9 + $0x110] sm:$0xff]
    %v395 = vld [vmem:[#allocation9 + $0x118] sm:$0xff]
    %v396 = vld [vmem:[#allocation9 + $0x120] sm:$0xff]
    %v397 = vld [vmem:[#allocation9 + $0x128] sm:$0xff]
    %v398 = vld [vmem:[#allocation9 + $0x130] sm:$0xff]
    %v399 = vld [vmem:[#allocation9 + $0x138] sm:$0xff]
    %v400 = vld [vmem:[#allocation9 + $0x140] sm:$0xff]
    %v401 = vld [vmem:[#allocation9 + $0x148] sm:$0xff]
    %v402 = vld [vmem:[#allocation9 + $0x150] sm:$0xff]
    %v403 = vld [vmem:[#allocation9 + $0x158] sm:$0xff]
    %v404 = vld [vmem:[#allocation9 + $0x160] sm:$0xff]
    %v405 = vld [vmem:[#allocation9 + $0x168] sm:$0xff]
    %v406 = vld [vmem:[#allocation9 + $0x170] sm:$0xff]
    %v407 = vld [vmem:[#allocation9 + $0x178] sm:$0xff]
    %v408 = vld [vmem:[%s4] sm:$0x1]
    %v410 = vlaneseq
    %v411 = vshrl.u32 %v410, 7
    %v412 = vsub.s32 0, %v411
    %v413 = vrot.slane %v408, %v412
    %v415 = vld [vmem:[#allocation3] sm:$0xff]
    %v416 = vld [vmem:[#allocation2] sm:$0xff]
    %v417 = vld [vmem:[#allocation2 + $0x8] sm:$0xff]
    %v418 = vld [vmem:[#allocation2 + $0x10] sm:$0xff]
    %419 = vmatprep.subr.mxu0 %v406
    %420 = vmatpush1.msra.mxu0 %v405
    %421 = vmatprep.subr.mxu0 %v403
    %422 = vmatpush1.msra.mxu0 %v402
    %423 = vmatprep.subr.mxu0 %v400
    %424 = vmatpush1.msra.mxu0 %v399
    %425 = vmatprep.subr.mxu0 %v397
    %426 = vmatpush1.msra.mxu0 %v396
    %427 = vmatprep.subr.mxu0 %v394
    %428 = vmatpush1.msra.mxu0 %v393
    %429 = vmatprep.subr.mxu0 %v391
    %430 = vmatpush1.msra.mxu0 %v390
    %431 = vmatprep.subr.mxu0 %v388
    %432 = vmatpush1.msra.mxu0 %v387
    %433 = vmatprep.subr.mxu0 %v385
    %434 = vmatpush1.msra.mxu0 %v384
    %435 = vmatprep.subr.mxu0 %v382
    %436 = vmatpush1.msra.mxu0 %v381
    %437 = vmatprep.subr.mxu0 %v379
    %438 = vmatpush1.msra.mxu0 %v378
    %439 = vmatprep.subr.mxu0 %v376
    %440 = vmatpush1.msra.mxu0 %v375
    %441 = vmatprep.subr.mxu0 %v373
    %442 = vmatpush1.msra.mxu0 %v372
    %443 = vmatprep.subr.mxu0 %v370
    %444 = vmatpush1.msra.mxu0 %v369
    %445 = vmatprep.subr.mxu0 %v367
    %446 = vmatpush1.msra.mxu0 %v366
    %447 = vmatprep.subr.mxu0 %v364
    %448 = vmatpush1.msra.mxu0 %v363
    %449 = vmatprep.subr.mxu0 %v361
    %450 = vmatpush1.msra.mxu0 %v360
    %451 = vmatprep.subr.mxu0 0.0
    %452 = vmatpush2.msra.mxu0 0.0
    %453 = vmatprep.subr.mxu0 0.0
    %454 = vmatpush2.msra.mxu0 0.0
    %455 = vmatprep.subr.mxu0 0.0
    %456 = vmatpush2.msra.mxu0 0.0
    %457 = vmatprep.subr.mxu0 0.0
    %458 = vmatpush2.msra.mxu0 0.0
    %459 = vmatprep.subr.mxu0 0.0
    %460 = vmatpush2.msra.mxu0 0.0
    %461 = vmatprep.subr.mxu0 0.0
    %462 = vmatpush2.msra.mxu0 0.0
    %463 = vmatprep.subr.mxu0 0.0
    %464 = vmatpush2.msra.mxu0 0.0
    %465 = vmatprep.subr.mxu0 0.0
    %466 = vmatpush2.msra.mxu0 0.0
    %467 = vmatprep.subr.mxu0 0.0
    %468 = vmatpush2.msra.mxu0 0.0
    %469 = vmatprep.subr.mxu0 0.0
    %470 = vmatpush2.msra.mxu0 0.0
    %471 = vmatprep.subr.mxu0 0.0
    %472 = vmatpush2.msra.mxu0 0.0
    %473 = vmatprep.subr.mxu0 0.0
    %474 = vmatpush2.msra.mxu0 0.0
    %475 = vmatprep.subr.mxu0 0.0
    %476 = vmatpush2.msra.mxu0 0.0
    %477 = vmatprep.subr.mxu0 0.0
    %478 = vmatpush2.msra.mxu0 0.0
    %479 = vmatprep.subr.mxu0 0.0
    %480 = vmatpush2.msra.mxu0 0.0
    %481 = vmatprep.subr.mxu0 0.0
    %482 = vmatpush2.msra.mxu0 0.0
    %483 = vmatprep.mubr.f32.mxu0 0.0
    %484 = vmatmul.mubr.f32.gmra.mxu0 %v415
    %v485 = vpop.f32.mrf.mxu0
    %v486 = vadd.f32 0.0, %v485
    %v487 = vpop.f32.mrf.mxu0
    %v488 = vadd.f32 0.0, %v487
    %489 = vdwg.mxu0
    %490 = vmatprep.subr.mxu0 0.0
    %491 = vmatpush1.msra.mxu0 %v407
    %492 = vmatprep.subr.mxu0 0.0
    %493 = vmatpush1.msra.mxu0 %v404
    %494 = vmatprep.subr.mxu0 0.0
    %495 = vmatpush1.msra.mxu0 %v401
    %496 = vmatprep.subr.mxu0 0.0
    %497 = vmatpush1.msra.mxu0 %v398
    %498 = vmatprep.subr.mxu0 0.0
    %499 = vmatpush1.msra.mxu0 %v395
    %500 = vmatprep.subr.mxu0 0.0
    %501 = vmatpush1.msra.mxu0 %v392
    %502 = vmatprep.subr.mxu0 0.0
    %503 = vmatpush1.msra.mxu0 %v389
    %504 = vmatprep.subr.mxu0 0.0
    %505 = vmatpush1.msra.mxu0 %v386
    %506 = vmatprep.subr.mxu0 0.0
    %507 = vmatpush1.msra.mxu0 %v383
    %508 = vmatprep.subr.mxu0 0.0
    %509 = vmatpush1.msra.mxu0 %v380
    %510 = vmatprep.subr.mxu0 0.0
    %511 = vmatpush1.msra.mxu0 %v377
    %512 = vmatprep.subr.mxu0 0.0
    %513 = vmatpush1.msra.mxu0 %v374
    %514 = vmatprep.subr.mxu0 0.0
    %515 = vmatpush1.msra.mxu0 %v371
    %516 = vmatprep.subr.mxu0 0.0
    %517 = vmatpush1.msra.mxu0 %v368
    %518 = vmatprep.subr.mxu0 0.0
    %519 = vmatpush1.msra.mxu0 %v365
    %520 = vmatprep.subr.mxu0 0.0
    %521 = vmatpush1.msra.mxu0 %v362
    %522 = vmatprep.subr.mxu0 0.0
    %523 = vmatpush2.msra.mxu0 0.0
    %524 = vmatprep.subr.mxu0 0.0
    %525 = vmatpush2.msra.mxu0 0.0
    %526 = vmatprep.subr.mxu0 0.0
    %527 = vmatpush2.msra.mxu0 0.0
    %528 = vmatprep.subr.mxu0 0.0
    %529 = vmatpush2.msra.mxu0 0.0
    %530 = vmatprep.subr.mxu0 0.0
    %531 = vmatpush2.msra.mxu0 0.0
    %532 = vmatprep.subr.mxu0 0.0
    %533 = vmatpush2.msra.mxu0 0.0
    %534 = vmatprep.subr.mxu0 0.0
    %535 = vmatpush2.msra.mxu0 0.0
    %536 = vmatprep.subr.mxu0 0.0
    %537 = vmatpush2.msra.mxu0 0.0
    %538 = vmatprep.subr.mxu0 0.0
    %539 = vmatpush2.msra.mxu0 0.0
    %540 = vmatprep.subr.mxu0 0.0
    %541 = vmatpush2.msra.mxu0 0.0
    %542 = vmatprep.subr.mxu0 0.0
    %543 = vmatpush2.msra.mxu0 0.0
    %544 = vmatprep.subr.mxu0 0.0
    %545 = vmatpush2.msra.mxu0 0.0
    %546 = vmatprep.subr.mxu0 0.0
    %547 = vmatpush2.msra.mxu0 0.0
    %548 = vmatprep.subr.mxu0 0.0
    %549 = vmatpush2.msra.mxu0 0.0
    %550 = vmatprep.subr.mxu0 0.0
    %551 = vmatpush2.msra.mxu0 0.0
    %552 = vmatprep.subr.mxu0 0.0
    %553 = vmatpush2.msra.mxu0 0.0
    %554 = vmatprep.mubr.f32.mxu0 0.0
    %555 = vmatmul.mubr.f32.gmra.mxu0 %v415
    %v556 = vpop.f32.mrf.mxu0
    %v557 = vadd.f32 0.0, %v556
    %v558 = vpop.f32.mrf.mxu0
    %559 = vdwg.mxu0
    %v560 = vadd.f32 %v416, %v486
    %v561 = vadd.f32 %v417, %v488
    %v562 = vxor.u32 %v560, 2147483648
    %v563 = vxor.u32 %v561, 2147483648
    %v564 = vmul.f32 %v562, 1.442695
    %v565 = vpow.pop %v564
    %v566 = vmul.f32 %v563, 1.442695
    %v567 = vpow.pop %v566
    %v568 = vadd.f32 %v565, 1.0
    %v569 = vadd.f32 %v567, 1.0
    %v570 = vrcp.pop %v568
    %v571 = vmul.f32 1.0, %v570
    %v572 = vrcp.pop %v569
    %v573 = vmul.f32 1.0, %v572
    %v574 = vadd.f32 %v557, %v413
    %v575 = vmul.f32 %v571, %v574
    %v576 = vadd.f32 %v418, %v575
    %v577 = vtanh.pop %v576
    %v578 = vsub.f32 1.0, %v573
    %v579 = vmul.f32 %v578, %v577
    %v580 = vmul.f32 %v573, %v415
    %v581 = vadd.f32 %v579, %v580
    %582 = vst [vmem:[#allocation10] sm:$0xff] %v581
    %s583 = scalar_lea.vmem [#allocation2], 24
    %v584 = vld [vmem:[%s583] sm:$0xff]
    %v585 = vld [vmem:[%s583 + $0x8] sm:$0xff]
    %v586 = vld [vmem:[%s583 + $0x10] sm:$0xff]
    %587 = vmatprep.subr.mxu0 %v406
    %588 = vmatpush1.msra.mxu0 %v405
    %589 = vmatprep.subr.mxu0 %v403
    %590 = vmatpush1.msra.mxu0 %v402
    %591 = vmatprep.subr.mxu0 %v400
    %592 = vmatpush1.msra.mxu0 %v399
    %593 = vmatprep.subr.mxu0 %v397
    %594 = vmatpush1.msra.mxu0 %v396
    %595 = vmatprep.subr.mxu0 %v394
    %596 = vmatpush1.msra.mxu0 %v393
    %597 = vmatprep.subr.mxu0 %v391
    %598 = vmatpush1.msra.mxu0 %v390
    %599 = vmatprep.subr.mxu0 %v388
    %600 = vmatpush1.msra.mxu0 %v387
    %601 = vmatprep.subr.mxu0 %v385
    %602 = vmatpush1.msra.mxu0 %v384
    %603 = vmatprep.subr.mxu0 %v382
    %604 = vmatpush1.msra.mxu0 %v381
    %605 = vmatprep.subr.mxu0 %v379
    %606 = vmatpush1.msra.mxu0 %v378
    %607 = vmatprep.subr.mxu0 %v376
    %608 = vmatpush1.msra.mxu0 %v375
    %609 = vmatprep.subr.mxu0 %v373
    %610 = vmatpush1.msra.mxu0 %v372
    %611 = vmatprep.subr.mxu0 %v370
    %612 = vmatpush1.msra.mxu0 %v369
    %613 = vmatprep.subr.mxu0 %v367
    %614 = vmatpush1.msra.mxu0 %v366
    %615 = vmatprep.subr.mxu0 %v364
    %616 = vmatpush1.msra.mxu0 %v363
    %617 = vmatprep.subr.mxu0 %v361
    %618 = vmatpush1.msra.mxu0 %v360
    %619 = vmatprep.subr.mxu0 0.0
    %620 = vmatpush2.msra.mxu0 0.0
    %621 = vmatprep.subr.mxu0 0.0
    %622 = vmatpush2.msra.mxu0 0.0
    %623 = vmatprep.subr.mxu0 0.0
    %624 = vmatpush2.msra.mxu0 0.0
    %625 = vmatprep.subr.mxu0 0.0
    %626 = vmatpush2.msra.mxu0 0.0
    %627 = vmatprep.subr.mxu0 0.0
    %628 = vmatpush2.msra.mxu0 0.0
    %629 = vmatprep.subr.mxu0 0.0
    %630 = vmatpush2.msra.mxu0 0.0
    %631 = vmatprep.subr.mxu0 0.0
    %632 = vmatpush2.msra.mxu0 0.0
    %633 = vmatprep.subr.mxu0 0.0
    %634 = vmatpush2.msra.mxu0 0.0
    %635 = vmatprep.subr.mxu0 0.0
    %636 = vmatpush2.msra.mxu0 0.0
    %637 = vmatprep.subr.mxu0 0.0
    %638 = vmatpush2.msra.mxu0 0.0
    %639 = vmatprep.subr.mxu0 0.0
    %640 = vmatpush2.msra.mxu0 0.0
    %641 = vmatprep.subr.mxu0 0.0
    %642 = vmatpush2.msra.mxu0 0.0
    %643 = vmatprep.subr.mxu0 0.0
    %644 = vmatpush2.msra.mxu0 0.0
    %645 = vmatprep.subr.mxu0 0.0
    %646 = vmatpush2.msra.mxu0 0.0
    %647 = vmatprep.subr.mxu0 0.0
    %648 = vmatpush2.msra.mxu0 0.0
    %649 = vmatprep.subr.mxu0 0.0
    %650 = vmatpush2.msra.mxu0 0.0
    %651 = vmatprep.mubr.f32.mxu0 0.0
    %652 = vmatmul.mubr.f32.gmra.mxu0 %v581
    %v653 = vpop.f32.mrf.mxu0
    %v654 = vadd.f32 0.0, %v653
    %v655 = vpop.f32.mrf.mxu0
    %v656 = vadd.f32 0.0, %v655
    %657 = vdwg.mxu0
    %658 = vmatprep.subr.mxu0 0.0
    %659 = vmatpush1.msra.mxu0 %v407
    %660 = vmatprep.subr.mxu0 0.0
    %661 = vmatpush1.msra.mxu0 %v404
    %662 = vmatprep.subr.mxu0 0.0
    %663 = vmatpush1.msra.mxu0 %v401
    %664 = vmatprep.subr.mxu0 0.0
    %665 = vmatpush1.msra.mxu0 %v398
    %666 = vmatprep.subr.mxu0 0.0
    %667 = vmatpush1.msra.mxu0 %v395
    %668 = vmatprep.subr.mxu0 0.0
    %669 = vmatpush1.msra.mxu0 %v392
    %670 = vmatprep.subr.mxu0 0.0
    %671 = vmatpush1.msra.mxu0 %v389
    %672 = vmatprep.subr.mxu0 0.0
    %673 = vmatpush1.msra.mxu0 %v386
    %674 = vmatprep.subr.mxu0 0.0
    %675 = vmatpush1.msra.mxu0 %v383
    %676 = vmatprep.subr.mxu0 0.0
    %677 = vmatpush1.msra.mxu0 %v380
    %678 = vmatprep.subr.mxu0 0.0
    %679 = vmatpush1.msra.mxu0 %v377
    %680 = vmatprep.subr.mxu0 0.0
    %681 = vmatpush1.msra.mxu0 %v374
    %682 = vmatprep.subr.mxu0 0.0
    %683 = vmatpush1.msra.mxu0 %v371
    %684 = vmatprep.subr.mxu0 0.0
    %685 = vmatpush1.msra.mxu0 %v368
    %686 = vmatprep.subr.mxu0 0.0
    %687 = vmatpush1.msra.mxu0 %v365
    %688 = vmatprep.subr.mxu0 0.0
    %689 = vmatpush1.msra.mxu0 %v362
    %690 = vmatprep.subr.mxu0 0.0
    %691 = vmatpush2.msra.mxu0 0.0
    %692 = vmatprep.subr.mxu0 0.0
    %693 = vmatpush2.msra.mxu0 0.0
    %694 = vmatprep.subr.mxu0 0.0
    %695 = vmatpush2.msra.mxu0 0.0
    %696 = vmatprep.subr.mxu0 0.0
    %697 = vmatpush2.msra.mxu0 0.0
    %698 = vmatprep.subr.mxu0 0.0
    %699 = vmatpush2.msra.mxu0 0.0
    %700 = vmatprep.subr.mxu0 0.0
    %701 = vmatpush2.msra.mxu0 0.0
    %702 = vmatprep.subr.mxu0 0.0
    %703 = vmatpush2.msra.mxu0 0.0
    %704 = vmatprep.subr.mxu0 0.0
    %705 = vmatpush2.msra.mxu0 0.0
    %706 = vmatprep.subr.mxu0 0.0
    %707 = vmatpush2.msra.mxu0 0.0
    %708 = vmatprep.subr.mxu0 0.0
    %709 = vmatpush2.msra.mxu0 0.0
    %710 = vmatprep.subr.mxu0 0.0
    %711 = vmatpush2.msra.mxu0 0.0
    %712 = vmatprep.subr.mxu0 0.0
    %713 = vmatpush2.msra.mxu0 0.0
    %714 = vmatprep.subr.mxu0 0.0
    %715 = vmatpush2.msra.mxu0 0.0
    %716 = vmatprep.subr.mxu0 0.0
    %717 = vmatpush2.msra.mxu0 0.0
    %718 = vmatprep.subr.mxu0 0.0
    %719 = vmatpush2.msra.mxu0 0.0
    %720 = vmatprep.subr.mxu0 0.0
    %721 = vmatpush2.msra.mxu0 0.0
    %722 = vmatprep.mubr.f32.mxu0 0.0
    %723 = vmatmul.mubr.f32.gmra.mxu0 %v581
    %v724 = vpop.f32.mrf.mxu0
    %v725 = vadd.f32 0.0, %v724
    %v726 = vpop.f32.mrf.mxu0
    %727 = vdwg.mxu0
    %v728 = vadd.f32 %v584, %v654
    %v729 = vadd.f32 %v585, %v656
    %v730 = vxor.u32 %v728, 2147483648
    %v731 = vxor.u32 %v729, 2147483648
    %v732 = vmul.f32 %v730, 1.442695
    %v733 = vpow.pop %v732
    %v734 = vmul.f32 %v731, 1.442695
    %v735 = vpow.pop %v734
    %v736 = vadd.f32 %v733, 1.0
    %v737 = vadd.f32 %v735, 1.0
    %v738 = vrcp.pop %v736
    %v739 = vmul.f32 1.0, %v738
    %v740 = vrcp.pop %v737
    %v741 = vmul.f32 1.0, %v740
    %v742 = vadd.f32 %v725, %v413
    %v743 = vmul.f32 %v739, %v742
    %v744 = vadd.f32 %v586, %v743
    %v745 = vtanh.pop %v744
    %v746 = vsub.f32 1.0, %v741
    %v747 = vmul.f32 %v746, %v745
    %v748 = vmul.f32 %v741, %v581
    %v749 = vadd.f32 %v747, %v748
    %s750 = scalar_lea.vmem [#allocation2], 48
    %v751 = vld [vmem:[%s750] sm:$0xff]
    %v752 = vld [vmem:[%s750 + $0x8] sm:$0xff]
    %v753 = vld [vmem:[%s750 + $0x10] sm:$0xff]
    %754 = vmatprep.subr.mxu0 %v406
    %755 = vmatpush1.msra.mxu0 %v405
    %756 = vmatprep.subr.mxu0 %v403
    %757 = vmatpush1.msra.mxu0 %v402
    %758 = vmatprep.subr.mxu0 %v400
    %759 = vmatpush1.msra.mxu0 %v399
    %760 = vmatprep.subr.mxu0 %v397
    %761 = vmatpush1.msra.mxu0 %v396
    %762 = vmatprep.subr.mxu0 %v394
    %763 = vmatpush1.msra.mxu0 %v393
    %764 = vmatprep.subr.mxu0 %v391
    %765 = vmatpush1.msra.mxu0 %v390
    %766 = vmatprep.subr.mxu0 %v388
    %767 = vmatpush1.msra.mxu0 %v387
    %768 = vmatprep.subr.mxu0 %v385
    %769 = vmatpush1.msra.mxu0 %v384
    %770 = vmatprep.subr.mxu0 %v382
    %771 = vmatpush1.msra.mxu0 %v381
    %772 = vmatprep.subr.mxu0 %v379
    %773 = vmatpush1.msra.mxu0 %v378
    %774 = vmatprep.subr.mxu0 %v376
    %775 = vmatpush1.msra.mxu0 %v375
    %776 = vmatprep.subr.mxu0 %v373
    %777 = vmatpush1.msra.mxu0 %v372
    %778 = vmatprep.subr.mxu0 %v370
    %779 = vmatpush1.msra.mxu0 %v369
    %780 = vmatprep.subr.mxu0 %v367
    %781 = vmatpush1.msra.mxu0 %v366
    %782 = vmatprep.subr.mxu0 %v364
    %783 = vmatpush1.msra.mxu0 %v363
    %784 = vmatprep.subr.mxu0 %v361
    %785 = vmatpush1.msra.mxu0 %v360
    %786 = vmatprep.subr.mxu0 0.0
    %787 = vmatpush2.msra.mxu0 0.0
    %788 = vmatprep.subr.mxu0 0.0
    %789 = vmatpush2.msra.mxu0 0.0
    %790 = vmatprep.subr.mxu0 0.0
    %791 = vmatpush2.msra.mxu0 0.0
    %792 = vmatprep.subr.mxu0 0.0
    %793 = vmatpush2.msra.mxu0 0.0
    %794 = vmatprep.subr.mxu0 0.0
    %795 = vmatpush2.msra.mxu0 0.0
    %796 = vmatprep.subr.mxu0 0.0
    %797 = vmatpush2.msra.mxu0 0.0
    %798 = vmatprep.subr.mxu0 0.0
    %799 = vmatpush2.msra.mxu0 0.0
    %800 = vmatprep.subr.mxu0 0.0
    %801 = vmatpush2.msra.mxu0 0.0
    %802 = vmatprep.subr.mxu0 0.0
    %803 = vmatpush2.msra.mxu0 0.0
    %804 = vmatprep.subr.mxu0 0.0
    %805 = vmatpush2.msra.mxu0 0.0
    %806 = vmatprep.subr.mxu0 0.0
    %807 = vmatpush2.msra.mxu0 0.0
    %808 = vmatprep.subr.mxu0 0.0
    %809 = vmatpush2.msra.mxu0 0.0
    %810 = vmatprep.subr.mxu0 0.0
    %811 = vmatpush2.msra.mxu0 0.0
    %812 = vmatprep.subr.mxu0 0.0
    %813 = vmatpush2.msra.mxu0 0.0
    %814 = vmatprep.subr.mxu0 0.0
    %815 = vmatpush2.msra.mxu0 0.0
    %816 = vmatprep.subr.mxu0 0.0
    %817 = vmatpush2.msra.mxu0 0.0
    %818 = vmatprep.mubr.f32.mxu0 0.0
    %819 = vmatmul.mubr.f32.gmra.mxu0 %v749
    %v820 = vpop.f32.mrf.mxu0
    %v821 = vadd.f32 0.0, %v820
    %v822 = vpop.f32.mrf.mxu0
    %v823 = vadd.f32 0.0, %v822
    %824 = vdwg.mxu0
    %825 = vmatprep.subr.mxu0 0.0
    %826 = vmatpush1.msra.mxu0 %v407
    %827 = vmatprep.subr.mxu0 0.0
    %828 = vmatpush1.msra.mxu0 %v404
    %829 = vmatprep.subr.mxu0 0.0
    %830 = vmatpush1.msra.mxu0 %v401
    %831 = vmatprep.subr.mxu0 0.0
    %832 = vmatpush1.msra.mxu0 %v398
    %833 = vmatprep.subr.mxu0 0.0
    %834 = vmatpush1.msra.mxu0 %v395
    %835 = vmatprep.subr.mxu0 0.0
    %836 = vmatpush1.msra.mxu0 %v392
    %837 = vmatprep.subr.mxu0 0.0
    %838 = vmatpush1.msra.mxu0 %v389
    %839 = vmatprep.subr.mxu0 0.0
    %840 = vmatpush1.msra.mxu0 %v386
    %841 = vmatprep.subr.mxu0 0.0
    %842 = vmatpush1.msra.mxu0 %v383
    %843 = vmatprep.subr.mxu0 0.0
    %844 = vmatpush1.msra.mxu0 %v380
    %845 = vmatprep.subr.mxu0 0.0
    %846 = vmatpush1.msra.mxu0 %v377
    %847 = vmatprep.subr.mxu0 0.0
    %848 = vmatpush1.msra.mxu0 %v374
    %849 = vmatprep.subr.mxu0 0.0
    %850 = vmatpush1.msra.mxu0 %v371
    %851 = vmatprep.subr.mxu0 0.0
    %852 = vmatpush1.msra.mxu0 %v368
    %853 = vmatprep.subr.mxu0 0.0
    %854 = vmatpush1.msra.mxu0 %v365
    %855 = vmatprep.subr.mxu0 0.0
    %856 = vmatpush1.msra.mxu0 %v362
    %857 = vmatprep.subr.mxu0 0.0
    %858 = vmatpush2.msra.mxu0 0.0
    %859 = vmatprep.subr.mxu0 0.0
    %860 = vmatpush2.msra.mxu0 0.0
    %861 = vmatprep.subr.mxu0 0.0
    %862 = vmatpush2.msra.mxu0 0.0
    %863 = vmatprep.subr.mxu0 0.0
    %864 = vmatpush2.msra.mxu0 0.0
    %865 = vmatprep.subr.mxu0 0.0
    %866 = vmatpush2.msra.mxu0 0.0
    %867 = vmatprep.subr.mxu0 0.0
    %868 = vmatpush2.msra.mxu0 0.0
    %869 = vmatprep.subr.mxu0 0.0
    %870 = vmatpush2.msra.mxu0 0.0
    %871 = vmatprep.subr.mxu0 0.0
    %872 = vmatpush2.msra.mxu0 0.0
    %873 = vmatprep.subr.mxu0 0.0
    %874 = vmatpush2.msra.mxu0 0.0
    %875 = vmatprep.subr.mxu0 0.0
    %876 = vmatpush2.msra.mxu0 0.0
    %877 = vmatprep.subr.mxu0 0.0
    %878 = vmatpush2.msra.mxu0 0.0
    %879 = vmatprep.subr.mxu0 0.0
    %880 = vmatpush2.msra.mxu0 0.0
    %881 = vmatprep.subr.mxu0 0.0
    %882 = vmatpush2.msra.mxu0 0.0
    %883 = vmatprep.subr.mxu0 0.0
    %884 = vmatpush2.msra.mxu0 0.0
    %885 = vmatprep.subr.mxu0 0.0
    %886 = vmatpush2.msra.mxu0 0.0
    %887 = vmatprep.subr.mxu0 0.0
    %888 = vmatpush2.msra.mxu0 0.0
    %889 = vmatprep.mubr.f32.mxu0 0.0
    %890 = vmatmul.mubr.f32.gmra.mxu0 %v749
    %v891 = vpop.f32.mrf.mxu0
    %v892 = vadd.f32 0.0, %v891
    %v893 = vpop.f32.mrf.mxu0
    %894 = vdwg.mxu0
    %v895 = vadd.f32 %v751, %v821
    %v896 = vadd.f32 %v752, %v823
    %v897 = vxor.u32 %v895, 2147483648
    %v898 = vxor.u32 %v896, 2147483648
    %v899 = vmul.f32 %v897, 1.442695
    %v900 = vpow.pop %v899
    %v901 = vmul.f32 %v898, 1.442695
    %v902 = vpow.pop %v901
    %v903 = vadd.f32 %v900, 1.0
    %v904 = vadd.f32 %v902, 1.0
    %v905 = vrcp.pop %v903
    %v906 = vmul.f32 1.0, %v905
    %v907 = vrcp.pop %v904
    %v908 = vmul.f32 1.0, %v907
    %v909 = vadd.f32 %v892, %v413
    %v910 = vmul.f32 %v906, %v909
    %v911 = vadd.f32 %v753, %v910
    %v912 = vtanh.pop %v911
    %v913 = vsub.f32 1.0, %v908
    %v914 = vmul.f32 %v913, %v912
    %v915 = vmul.f32 %v908, %v749
    %v916 = vadd.f32 %v914, %v915
    %s917 = scalar_lea.vmem [#allocation10], 8
    %918 = vst [vmem:[%s917] sm:$0xff] %v916
    %s919 = scalar_lea.vmem [#allocation2], 72
    %v920 = vld [vmem:[%s919] sm:$0xff]
    %v921 = vld [vmem:[%s919 + $0x8] sm:$0xff]
    %v922 = vld [vmem:[%s919 + $0x10] sm:$0xff]
    %923 = vmatprep.subr.mxu0 %v406
    %924 = vmatpush1.msra.mxu0 %v405
    %925 = vmatprep.subr.mxu0 %v403
    %926 = vmatpush1.msra.mxu0 %v402
    %927 = vmatprep.subr.mxu0 %v400
    %928 = vmatpush1.msra.mxu0 %v399
    %929 = vmatprep.subr.mxu0 %v397
    %930 = vmatpush1.msra.mxu0 %v396
    %931 = vmatprep.subr.mxu0 %v394
    %932 = vmatpush1.msra.mxu0 %v393
    %933 = vmatprep.subr.mxu0 %v391
    %934 = vmatpush1.msra.mxu0 %v390
    %935 = vmatprep.subr.mxu0 %v388
    %936 = vmatpush1.msra.mxu0 %v387
    %937 = vmatprep.subr.mxu0 %v385
    %938 = vmatpush1.msra.mxu0 %v384
    %939 = vmatprep.subr.mxu0 %v382
    %940 = vmatpush1.msra.mxu0 %v381
    %941 = vmatprep.subr.mxu0 %v379
    %942 = vmatpush1.msra.mxu0 %v378
    %943 = vmatprep.subr.mxu0 %v376
    %944 = vmatpush1.msra.mxu0 %v375
    %945 = vmatprep.subr.mxu0 %v373
    %946 = vmatpush1.msra.mxu0 %v372
    %947 = vmatprep.subr.mxu0 %v370
    %948 = vmatpush1.msra.mxu0 %v369
    %949 = vmatprep.subr.mxu0 %v367
    %950 = vmatpush1.msra.mxu0 %v366
    %951 = vmatprep.subr.mxu0 %v364
    %952 = vmatpush1.msra.mxu0 %v363
    %953 = vmatprep.subr.mxu0 %v361
    %954 = vmatpush1.msra.mxu0 %v360
    %955 = vmatprep.subr.mxu0 0.0
    %956 = vmatpush2.msra.mxu0 0.0
    %957 = vmatprep.subr.mxu0 0.0
    %958 = vmatpush2.msra.mxu0 0.0
    %959 = vmatprep.subr.mxu0 0.0
    %960 = vmatpush2.msra.mxu0 0.0
    %961 = vmatprep.subr.mxu0 0.0
    %962 = vmatpush2.msra.mxu0 0.0
    %963 = vmatprep.subr.mxu0 0.0
    %964 = vmatpush2.msra.mxu0 0.0
    %965 = vmatprep.subr.mxu0 0.0
    %966 = vmatpush2.msra.mxu0 0.0
    %967 = vmatprep.subr.mxu0 0.0
    %968 = vmatpush2.msra.mxu0 0.0
    %969 = vmatprep.subr.mxu0 0.0
    %970 = vmatpush2.msra.mxu0 0.0
    %971 = vmatprep.subr.mxu0 0.0
    %972 = vmatpush2.msra.mxu0 0.0
    %973 = vmatprep.subr.mxu0 0.0
    %974 = vmatpush2.msra.mxu0 0.0
    %975 = vmatprep.subr.mxu0 0.0
    %976 = vmatpush2.msra.mxu0 0.0
    %977 = vmatprep.subr.mxu0 0.0
    %978 = vmatpush2.msra.mxu0 0.0
    %979 = vmatprep.subr.mxu0 0.0
    %980 = vmatpush2.msra.mxu0 0.0
    %981 = vmatprep.subr.mxu0 0.0
    %982 = vmatpush2.msra.mxu0 0.0
    %983 = vmatprep.subr.mxu0 0.0
    %984 = vmatpush2.msra.mxu0 0.0
    %985 = vmatprep.subr.mxu0 0.0
    %986 = vmatpush2.msra.mxu0 0.0
    %987 = vmatprep.mubr.f32.mxu0 0.0
    %988 = vmatmul.mubr.f32.gmra.mxu0 %v916
    %v989 = vpop.f32.mrf.mxu0
    %v990 = vadd.f32 0.0, %v989
    %v991 = vpop.f32.mrf.mxu0
    %v992 = vadd.f32 0.0, %v991
    %993 = vdwg.mxu0
    %994 = vmatprep.subr.mxu0 0.0
    %995 = vmatpush1.msra.mxu0 %v407
    %996 = vmatprep.subr.mxu0 0.0
    %997 = vmatpush1.msra.mxu0 %v404
    %998 = vmatprep.subr.mxu0 0.0
    %999 = vmatpush1.msra.mxu0 %v401
    %1000 = vmatprep.subr.mxu0 0.0
    %1001 = vmatpush1.msra.mxu0 %v398
    %1002 = vmatprep.subr.mxu0 0.0
    %1003 = vmatpush1.msra.mxu0 %v395
    %1004 = vmatprep.subr.mxu0 0.0
    %1005 = vmatpush1.msra.mxu0 %v392
    %1006 = vmatprep.subr.mxu0 0.0
    %1007 = vmatpush1.msra.mxu0 %v389
    %1008 = vmatprep.subr.mxu0 0.0
    %1009 = vmatpush1.msra.mxu0 %v386
    %1010 = vmatprep.subr.mxu0 0.0
    %1011 = vmatpush1.msra.mxu0 %v383
    %1012 = vmatprep.subr.mxu0 0.0
    %1013 = vmatpush1.msra.mxu0 %v380
    %1014 = vmatprep.subr.mxu0 0.0
    %1015 = vmatpush1.msra.mxu0 %v377
    %1016 = vmatprep.subr.mxu0 0.0
    %1017 = vmatpush1.msra.mxu0 %v374
    %1018 = vmatprep.subr.mxu0 0.0
    %1019 = vmatpush1.msra.mxu0 %v371
    %1020 = vmatprep.subr.mxu0 0.0
    %1021 = vmatpush1.msra.mxu0 %v368
    %1022 = vmatprep.subr.mxu0 0.0
    %1023 = vmatpush1.msra.mxu0 %v365
    %1024 = vmatprep.subr.mxu0 0.0
    %1025 = vmatpush1.msra.mxu0 %v362
    %1026 = vmatprep.subr.mxu0 0.0
    %1027 = vmatpush2.msra.mxu0 0.0
    %1028 = vmatprep.subr.mxu0 0.0
    %1029 = vmatpush2.msra.mxu0 0.0
    %1030 = vmatprep.subr.mxu0 0.0
    %1031 = vmatpush2.msra.mxu0 0.0
    %1032 = vmatprep.subr.mxu0 0.0
    %1033 = vmatpush2.msra.mxu0 0.0
    %1034 = vmatprep.subr.mxu0 0.0
    %1035 = vmatpush2.msra.mxu0 0.0
    %1036 = vmatprep.subr.mxu0 0.0
    %1037 = vmatpush2.msra.mxu0 0.0
    %1038 = vmatprep.subr.mxu0 0.0
    %1039 = vmatpush2.msra.mxu0 0.0
    %1040 = vmatprep.subr.mxu0 0.0
    %1041 = vmatpush2.msra.mxu0 0.0
    %1042 = vmatprep.subr.mxu0 0.0
    %1043 = vmatpush2.msra.mxu0 0.0
    %1044 = vmatprep.subr.mxu0 0.0
    %1045 = vmatpush2.msra.mxu0 0.0
    %1046 = vmatprep.subr.mxu0 0.0
    %1047 = vmatpush2.msra.mxu0 0.0
    %1048 = vmatprep.subr.mxu0 0.0
    %1049 = vmatpush2.msra.mxu0 0.0
    %1050 = vmatprep.subr.mxu0 0.0
    %1051 = vmatpush2.msra.mxu0 0.0
    %1052 = vmatprep.subr.mxu0 0.0
    %1053 = vmatpush2.msra.mxu0 0.0
    %1054 = vmatprep.subr.mxu0 0.0
    %1055 = vmatpush2.msra.mxu0 0.0
    %1056 = vmatprep.subr.mxu0 0.0
    %1057 = vmatpush2.msra.mxu0 0.0
    %1058 = vmatprep.mubr.f32.mxu0 0.0
    %1059 = vmatmul.mubr.f32.gmra.mxu0 %v916
    %v1060 = vpop.f32.mrf.mxu0
    %v1061 = vadd.f32 0.0, %v1060
    %v1062 = vpop.f32.mrf.mxu0
    %1063 = vdwg.mxu0
    %v1064 = vadd.f32 %v920, %v990
    %v1065 = vadd.f32 %v921, %v992
    %v1066 = vxor.u32 %v1064, 2147483648
    %v1067 = vxor.u32 %v1065, 2147483648
    %v1068 = vmul.f32 %v1066, 1.442695
    %v1069 = vpow.pop %v1068
    %v1070 = vmul.f32 %v1067, 1.442695
    %v1071 = vpow.pop %v1070
    %v1072 = vadd.f32 %v1069, 1.0
    %v1073 = vadd.f32 %v1071, 1.0
    %v1074 = vrcp.pop %v1072
    %v1075 = vmul.f32 1.0, %v1074
    %v1076 = vrcp.pop %v1073
    %v1077 = vmul.f32 1.0, %v1076
    %v1078 = vadd.f32 %v1061, %v413
    %v1079 = vmul.f32 %v1075, %v1078
    %v1080 = vadd.f32 %v922, %v1079
    %v1081 = vtanh.pop %v1080
    %v1082 = vsub.f32 1.0, %v1077
    %v1083 = vmul.f32 %v1082, %v1081
    %v1084 = vmul.f32 %v1077, %v916
    %v1085 = vadd.f32 %v1083, %v1084
    %s1086 = scalar_lea.vmem [#allocation2], 96
    %v1087 = vld [vmem:[%s1086] sm:$0xff]
    %v1088 = vld [vmem:[%s1086 + $0x8] sm:$0xff]
    %v1089 = vld [vmem:[%s1086 + $0x10] sm:$0xff]
    %1090 = vmatprep.subr.mxu0 %v406
    %1091 = vmatpush1.msra.mxu0 %v405
    %1092 = vmatprep.subr.mxu0 %v403
    %1093 = vmatpush1.msra.mxu0 %v402
    %1094 = vmatprep.subr.mxu0 %v400
    %1095 = vmatpush1.msra.mxu0 %v399
    %1096 = vmatprep.subr.mxu0 %v397
    %1097 = vmatpush1.msra.mxu0 %v396
    %1098 = vmatprep.subr.mxu0 %v394
    %1099 = vmatpush1.msra.mxu0 %v393
    %1100 = vmatprep.subr.mxu0 %v391
    %1101 = vmatpush1.msra.mxu0 %v390
    %1102 = vmatprep.subr.mxu0 %v388
    %1103 = vmatpush1.msra.mxu0 %v387
    %1104 = vmatprep.subr.mxu0 %v385
    %1105 = vmatpush1.msra.mxu0 %v384
    %1106 = vmatprep.subr.mxu0 %v382
    %1107 = vmatpush1.msra.mxu0 %v381
    %1108 = vmatprep.subr.mxu0 %v379
    %1109 = vmatpush1.msra.mxu0 %v378
    %1110 = vmatprep.subr.mxu0 %v376
    %1111 = vmatpush1.msra.mxu0 %v375
    %1112 = vmatprep.subr.mxu0 %v373
    %1113 = vmatpush1.msra.mxu0 %v372
    %1114 = vmatprep.subr.mxu0 %v370
    %1115 = vmatpush1.msra.mxu0 %v369
    %1116 = vmatprep.subr.mxu0 %v367
    %1117 = vmatpush1.msra.mxu0 %v366
    %1118 = vmatprep.subr.mxu0 %v364
    %1119 = vmatpush1.msra.mxu0 %v363
    %1120 = vmatprep.subr.mxu0 %v361
    %1121 = vmatpush1.msra.mxu0 %v360
    %1122 = vmatprep.subr.mxu0 0.0
    %1123 = vmatpush2.msra.mxu0 0.0
    %1124 = vmatprep.subr.mxu0 0.0
    %1125 = vmatpush2.msra.mxu0 0.0
    %1126 = vmatprep.subr.mxu0 0.0
    %1127 = vmatpush2.msra.mxu0 0.0
    %1128 = vmatprep.subr.mxu0 0.0
    %1129 = vmatpush2.msra.mxu0 0.0
    %1130 = vmatprep.subr.mxu0 0.0
    %1131 = vmatpush2.msra.mxu0 0.0
    %1132 = vmatprep.subr.mxu0 0.0
    %1133 = vmatpush2.msra.mxu0 0.0
    %1134 = vmatprep.subr.mxu0 0.0
    %1135 = vmatpush2.msra.mxu0 0.0
    %1136 = vmatprep.subr.mxu0 0.0
    %1137 = vmatpush2.msra.mxu0 0.0
    %1138 = vmatprep.subr.mxu0 0.0
    %1139 = vmatpush2.msra.mxu0 0.0
    %1140 = vmatprep.subr.mxu0 0.0
    %1141 = vmatpush2.msra.mxu0 0.0
    %1142 = vmatprep.subr.mxu0 0.0
    %1143 = vmatpush2.msra.mxu0 0.0
    %1144 = vmatprep.subr.mxu0 0.0
    %1145 = vmatpush2.msra.mxu0 0.0
    %1146 = vmatprep.subr.mxu0 0.0
    %1147 = vmatpush2.msra.mxu0 0.0
    %1148 = vmatprep.subr.mxu0 0.0
    %1149 = vmatpush2.msra.mxu0 0.0
    %1150 = vmatprep.subr.mxu0 0.0
    %1151 = vmatpush2.msra.mxu0 0.0
    %1152 = vmatprep.subr.mxu0 0.0
    %1153 = vmatpush2.msra.mxu0 0.0
    %1154 = vmatprep.mubr.f32.mxu0 0.0
    %1155 = vmatmul.mubr.f32.gmra.mxu0 %v1085
    %v1156 = vpop.f32.mrf.mxu0
    %v1157 = vadd.f32 0.0, %v1156
    %v1158 = vpop.f32.mrf.mxu0
    %v1159 = vadd.f32 0.0, %v1158
    %1160 = vdwg.mxu0
    %1161 = vmatprep.subr.mxu0 0.0
    %1162 = vmatpush1.msra.mxu0 %v407
    %1163 = vmatprep.subr.mxu0 0.0
    %1164 = vmatpush1.msra.mxu0 %v404
    %1165 = vmatprep.subr.mxu0 0.0
    %1166 = vmatpush1.msra.mxu0 %v401
    %1167 = vmatprep.subr.mxu0 0.0
    %1168 = vmatpush1.msra.mxu0 %v398
    %1169 = vmatprep.subr.mxu0 0.0
    %1170 = vmatpush1.msra.mxu0 %v395
    %1171 = vmatprep.subr.mxu0 0.0
    %1172 = vmatpush1.msra.mxu0 %v392
    %1173 = vmatprep.subr.mxu0 0.0
    %1174 = vmatpush1.msra.mxu0 %v389
    %1175 = vmatprep.subr.mxu0 0.0
    %1176 = vmatpush1.msra.mxu0 %v386
    %1177 = vmatprep.subr.mxu0 0.0
    %1178 = vmatpush1.msra.mxu0 %v383
    %1179 = vmatprep.subr.mxu0 0.0
    %1180 = vmatpush1.msra.mxu0 %v380
    %1181 = vmatprep.subr.mxu0 0.0
    %1182 = vmatpush1.msra.mxu0 %v377
    %1183 = vmatprep.subr.mxu0 0.0
    %1184 = vmatpush1.msra.mxu0 %v374
    %1185 = vmatprep.subr.mxu0 0.0
    %1186 = vmatpush1.msra.mxu0 %v371
    %1187 = vmatprep.subr.mxu0 0.0
    %1188 = vmatpush1.msra.mxu0 %v368
    %1189 = vmatprep.subr.mxu0 0.0
    %1190 = vmatpush1.msra.mxu0 %v365
    %1191 = vmatprep.subr.mxu0 0.0
    %1192 = vmatpush1.msra.mxu0 %v362
    %1193 = vmatprep.subr.mxu0 0.0
    %1194 = vmatpush2.msra.mxu0 0.0
    %1195 = vmatprep.subr.mxu0 0.0
    %1196 = vmatpush2.msra.mxu0 0.0
    %1197 = vmatprep.subr.mxu0 0.0
    %1198 = vmatpush2.msra.mxu0 0.0
    %1199 = vmatprep.subr.mxu0 0.0
    %1200 = vmatpush2.msra.mxu0 0.0
    %1201 = vmatprep.subr.mxu0 0.0
    %1202 = vmatpush2.msra.mxu0 0.0
    %1203 = vmatprep.subr.mxu0 0.0
    %1204 = vmatpush2.msra.mxu0 0.0
    %1205 = vmatprep.subr.mxu0 0.0
    %1206 = vmatpush2.msra.mxu0 0.0
    %1207 = vmatprep.subr.mxu0 0.0
    %1208 = vmatpush2.msra.mxu0 0.0
    %1209 = vmatprep.subr.mxu0 0.0
    %1210 = vmatpush2.msra.mxu0 0.0
    %1211 = vmatprep.subr.mxu0 0.0
    %1212 = vmatpush2.msra.mxu0 0.0
    %1213 = vmatprep.subr.mxu0 0.0
    %1214 = vmatpush2.msra.mxu0 0.0
    %1215 = vmatprep.subr.mxu0 0.0
    %1216 = vmatpush2.msra.mxu0 0.0
    %1217 = vmatprep.subr.mxu0 0.0
    %1218 = vmatpush2.msra.mxu0 0.0
    %1219 = vmatprep.subr.mxu0 0.0
    %1220 = vmatpush2.msra.mxu0 0.0
    %1221 = vmatprep.subr.mxu0 0.0
    %1222 = vmatpush2.msra.mxu0 0.0
    %1223 = vmatprep.subr.mxu0 0.0
    %1224 = vmatpush2.msra.mxu0 0.0
    %1225 = vmatprep.mubr.f32.mxu0 0.0
    %1226 = vmatmul.mubr.f32.gmra.mxu0 %v1085
    %v1227 = vpop.f32.mrf.mxu0
    %v1228 = vadd.f32 0.0, %v1227
    %v1229 = vpop.f32.mrf.mxu0
    %1230 = vdwg.mxu0
    %v1231 = vadd.f32 %v1087, %v1157
    %v1232 = vadd.f32 %v1088, %v1159
    %v1233 = vxor.u32 %v1231, 2147483648
    %v1234 = vxor.u32 %v1232, 2147483648
    %v1235 = vmul.f32 %v1233, 1.442695
    %v1236 = vpow.pop %v1235
    %v1237 = vmul.f32 %v1234, 1.442695
    %v1238 = vpow.pop %v1237
    %v1239 = vadd.f32 %v1236, 1.0
    %v1240 = vadd.f32 %v1238, 1.0
    %v1241 = vrcp.pop %v1239
    %v1242 = vmul.f32 1.0, %v1241
    %v1243 = vrcp.pop %v1240
    %v1244 = vmul.f32 1.0, %v1243
    %v1245 = vadd.f32 %v1228, %v413
    %v1246 = vmul.f32 %v1242, %v1245
    %v1247 = vadd.f32 %v1089, %v1246
    %v1248 = vtanh.pop %v1247
    %v1249 = vsub.f32 1.0, %v1244
    %v1250 = vmul.f32 %v1249, %v1248
    %v1251 = vmul.f32 %v1244, %v1085
    %v1252 = vadd.f32 %v1250, %v1251
    %s1253 = scalar_lea.vmem [#allocation10], 16
    %1254 = vst [vmem:[%s1253] sm:$0xff] %v1252
    %s1255 = scalar_lea.vmem [#allocation2], 120
    %v1256 = vld [vmem:[%s1255] sm:$0xff]
    %v1257 = vld [vmem:[%s1255 + $0x8] sm:$0xff]
    %v1258 = vld [vmem:[%s1255 + $0x10] sm:$0xff]
    %1259 = vmatprep.subr.mxu0 %v406
    %1260 = vmatpush1.msra.mxu0 %v405
    %1261 = vmatprep.subr.mxu0 %v403
    %1262 = vmatpush1.msra.mxu0 %v402
    %1263 = vmatprep.subr.mxu0 %v400
    %1264 = vmatpush1.msra.mxu0 %v399
    %1265 = vmatprep.subr.mxu0 %v397
    %1266 = vmatpush1.msra.mxu0 %v396
    %1267 = vmatprep.subr.mxu0 %v394
    %1268 = vmatpush1.msra.mxu0 %v393
    %1269 = vmatprep.subr.mxu0 %v391
    %1270 = vmatpush1.msra.mxu0 %v390
    %1271 = vmatprep.subr.mxu0 %v388
    %1272 = vmatpush1.msra.mxu0 %v387
    %1273 = vmatprep.subr.mxu0 %v385
    %1274 = vmatpush1.msra.mxu0 %v384
    %1275 = vmatprep.subr.mxu0 %v382
    %1276 = vmatpush1.msra.mxu0 %v381
    %1277 = vmatprep.subr.mxu0 %v379
    %1278 = vmatpush1.msra.mxu0 %v378
    %1279 = vmatprep.subr.mxu0 %v376
    %1280 = vmatpush1.msra.mxu0 %v375
    %1281 = vmatprep.subr.mxu0 %v373
    %1282 = vmatpush1.msra.mxu0 %v372
    %1283 = vmatprep.subr.mxu0 %v370
    %1284 = vmatpush1.msra.mxu0 %v369
    %1285 = vmatprep.subr.mxu0 %v367
    %1286 = vmatpush1.msra.mxu0 %v366
    %1287 = vmatprep.subr.mxu0 %v364
    %1288 = vmatpush1.msra.mxu0 %v363
    %1289 = vmatprep.subr.mxu0 %v361
    %1290 = vmatpush1.msra.mxu0 %v360
    %1291 = vmatprep.subr.mxu0 0.0
    %1292 = vmatpush2.msra.mxu0 0.0
    %1293 = vmatprep.subr.mxu0 0.0
    %1294 = vmatpush2.msra.mxu0 0.0
    %1295 = vmatprep.subr.mxu0 0.0
    %1296 = vmatpush2.msra.mxu0 0.0
    %1297 = vmatprep.subr.mxu0 0.0
    %1298 = vmatpush2.msra.mxu0 0.0
    %1299 = vmatprep.subr.mxu0 0.0
    %1300 = vmatpush2.msra.mxu0 0.0
    %1301 = vmatprep.subr.mxu0 0.0
    %1302 = vmatpush2.msra.mxu0 0.0
    %1303 = vmatprep.subr.mxu0 0.0
    %1304 = vmatpush2.msra.mxu0 0.0
    %1305 = vmatprep.subr.mxu0 0.0
    %1306 = vmatpush2.msra.mxu0 0.0
    %1307 = vmatprep.subr.mxu0 0.0
    %1308 = vmatpush2.msra.mxu0 0.0
    %1309 = vmatprep.subr.mxu0 0.0
    %1310 = vmatpush2.msra.mxu0 0.0
    %1311 = vmatprep.subr.mxu0 0.0
    %1312 = vmatpush2.msra.mxu0 0.0
    %1313 = vmatprep.subr.mxu0 0.0
    %1314 = vmatpush2.msra.mxu0 0.0
    %1315 = vmatprep.subr.mxu0 0.0
    %1316 = vmatpush2.msra.mxu0 0.0
    %1317 = vmatprep.subr.mxu0 0.0
    %1318 = vmatpush2.msra.mxu0 0.0
    %1319 = vmatprep.subr.mxu0 0.0
    %1320 = vmatpush2.msra.mxu0 0.0
    %1321 = vmatprep.subr.mxu0 0.0
    %1322 = vmatpush2.msra.mxu0 0.0
    %1323 = vmatprep.mubr.f32.mxu0 0.0
    %1324 = vmatmul.mubr.f32.gmra.mxu0 %v1252
    %v1325 = vpop.f32.mrf.mxu0
    %v1326 = vadd.f32 0.0, %v1325
    %v1327 = vpop.f32.mrf.mxu0
    %v1328 = vadd.f32 0.0, %v1327
    %1329 = vdwg.mxu0
    %1330 = vmatprep.subr.mxu0 0.0
    %1331 = vmatpush1.msra.mxu0 %v407
    %1332 = vmatprep.subr.mxu0 0.0
    %1333 = vmatpush1.msra.mxu0 %v404
    %1334 = vmatprep.subr.mxu0 0.0
    %1335 = vmatpush1.msra.mxu0 %v401
    %1336 = vmatprep.subr.mxu0 0.0
    %1337 = vmatpush1.msra.mxu0 %v398
    %1338 = vmatprep.subr.mxu0 0.0
    %1339 = vmatpush1.msra.mxu0 %v395
    %1340 = vmatprep.subr.mxu0 0.0
    %1341 = vmatpush1.msra.mxu0 %v392
    %1342 = vmatprep.subr.mxu0 0.0
    %1343 = vmatpush1.msra.mxu0 %v389
    %1344 = vmatprep.subr.mxu0 0.0
    %1345 = vmatpush1.msra.mxu0 %v386
    %1346 = vmatprep.subr.mxu0 0.0
    %1347 = vmatpush1.msra.mxu0 %v383
    %1348 = vmatprep.subr.mxu0 0.0
    %1349 = vmatpush1.msra.mxu0 %v380
    %1350 = vmatprep.subr.mxu0 0.0
    %1351 = vmatpush1.msra.mxu0 %v377
    %1352 = vmatprep.subr.mxu0 0.0
    %1353 = vmatpush1.msra.mxu0 %v374
    %1354 = vmatprep.subr.mxu0 0.0
    %1355 = vmatpush1.msra.mxu0 %v371
    %1356 = vmatprep.subr.mxu0 0.0
    %1357 = vmatpush1.msra.mxu0 %v368
    %1358 = vmatprep.subr.mxu0 0.0
    %1359 = vmatpush1.msra.mxu0 %v365
    %1360 = vmatprep.subr.mxu0 0.0
    %1361 = vmatpush1.msra.mxu0 %v362
    %1362 = vmatprep.subr.mxu0 0.0
    %1363 = vmatpush2.msra.mxu0 0.0
    %1364 = vmatprep.subr.mxu0 0.0
    %1365 = vmatpush2.msra.mxu0 0.0
    %1366 = vmatprep.subr.mxu0 0.0
    %1367 = vmatpush2.msra.mxu0 0.0
    %1368 = vmatprep.subr.mxu0 0.0
    %1369 = vmatpush2.msra.mxu0 0.0
    %1370 = vmatprep.subr.mxu0 0.0
    %1371 = vmatpush2.msra.mxu0 0.0
    %1372 = vmatprep.subr.mxu0 0.0
    %1373 = vmatpush2.msra.mxu0 0.0
    %1374 = vmatprep.subr.mxu0 0.0
    %1375 = vmatpush2.msra.mxu0 0.0
    %1376 = vmatprep.subr.mxu0 0.0
    %1377 = vmatpush2.msra.mxu0 0.0
    %1378 = vmatprep.subr.mxu0 0.0
    %1379 = vmatpush2.msra.mxu0 0.0
    %1380 = vmatprep.subr.mxu0 0.0
    %1381 = vmatpush2.msra.mxu0 0.0
    %1382 = vmatprep.subr.mxu0 0.0
    %1383 = vmatpush2.msra.mxu0 0.0
    %1384 = vmatprep.subr.mxu0 0.0
    %1385 = vmatpush2.msra.mxu0 0.0
    %1386 = vmatprep.subr.mxu0 0.0
    %1387 = vmatpush2.msra.mxu0 0.0
    %1388 = vmatprep.subr.mxu0 0.0
    %1389 = vmatpush2.msra.mxu0 0.0
    %1390 = vmatprep.subr.mxu0 0.0
    %1391 = vmatpush2.msra.mxu0 0.0
    %1392 = vmatprep.subr.mxu0 0.0
    %1393 = vmatpush2.msra.mxu0 0.0
    %1394 = vmatprep.mubr.f32.mxu0 0.0
    %1395 = vmatmul.mubr.f32.gmra.mxu0 %v1252
    %v1396 = vpop.f32.mrf.mxu0
    %v1397 = vadd.f32 0.0, %v1396
    %v1398 = vpop.f32.mrf.mxu0
    %1399 = vdwg.mxu0
    %v1400 = vadd.f32 %v1256, %v1326
    %v1401 = vadd.f32 %v1257, %v1328
    %v1402 = vxor.u32 %v1400, 2147483648
    %v1403 = vxor.u32 %v1401, 2147483648
    %v1404 = vmul.f32 %v1402, 1.442695
    %v1405 = vpow.pop %v1404
    %v1406 = vmul.f32 %v1403, 1.442695
    %v1407 = vpow.pop %v1406
    %v1408 = vadd.f32 %v1405, 1.0
    %v1409 = vadd.f32 %v1407, 1.0
    %v1410 = vrcp.pop %v1408
    %v1411 = vmul.f32 1.0, %v1410
    %v1412 = vrcp.pop %v1409
    %v1413 = vmul.f32 1.0, %v1412
    %v1414 = vadd.f32 %v1397, %v413
    %v1415 = vmul.f32 %v1411, %v1414
    %v1416 = vadd.f32 %v1258, %v1415
    %v1417 = vtanh.pop %v1416
    %v1418 = vsub.f32 1.0, %v1413
    %v1419 = vmul.f32 %v1418, %v1417
    %v1420 = vmul.f32 %v1413, %v1252
    %v1421 = vadd.f32 %v1419, %v1420
    %s1422 = scalar_lea.vmem [#allocation2], 144
    %v1423 = vld [vmem:[%s1422] sm:$0xff]
    %v1424 = vld [vmem:[%s1422 + $0x8] sm:$0xff]
    %v1425 = vld [vmem:[%s1422 + $0x10] sm:$0xff]
    %1426 = vmatprep.subr.mxu0 %v406
    %1427 = vmatpush1.msra.mxu0 %v405
    %1428 = vmatprep.subr.mxu0 %v403
    %1429 = vmatpush1.msra.mxu0 %v402
    %1430 = vmatprep.subr.mxu0 %v400
    %1431 = vmatpush1.msra.mxu0 %v399
    %1432 = vmatprep.subr.mxu0 %v397
    %1433 = vmatpush1.msra.mxu0 %v396
    %1434 = vmatprep.subr.mxu0 %v394
    %1435 = vmatpush1.msra.mxu0 %v393
    %1436 = vmatprep.subr.mxu0 %v391
    %1437 = vmatpush1.msra.mxu0 %v390
    %1438 = vmatprep.subr.mxu0 %v388
    %1439 = vmatpush1.msra.mxu0 %v387
    %1440 = vmatprep.subr.mxu0 %v385
    %1441 = vmatpush1.msra.mxu0 %v384
    %1442 = vmatprep.subr.mxu0 %v382
    %1443 = vmatpush1.msra.mxu0 %v381
    %1444 = vmatprep.subr.mxu0 %v379
    %1445 = vmatpush1.msra.mxu0 %v378
    %1446 = vmatprep.subr.mxu0 %v376
    %1447 = vmatpush1.msra.mxu0 %v375
    %1448 = vmatprep.subr.mxu0 %v373
    %1449 = vmatpush1.msra.mxu0 %v372
    %1450 = vmatprep.subr.mxu0 %v370
    %1451 = vmatpush1.msra.mxu0 %v369
    %1452 = vmatprep.subr.mxu0 %v367
    %1453 = vmatpush1.msra.mxu0 %v366
    %1454 = vmatprep.subr.mxu0 %v364
    %1455 = vmatpush1.msra.mxu0 %v363
    %1456 = vmatprep.subr.mxu0 %v361
    %1457 = vmatpush1.msra.mxu0 %v360
    %1458 = vmatprep.subr.mxu0 0.0
    %1459 = vmatpush2.msra.mxu0 0.0
    %1460 = vmatprep.subr.mxu0 0.0
    %1461 = vmatpush2.msra.mxu0 0.0
    %1462 = vmatprep.subr.mxu0 0.0
    %1463 = vmatpush2.msra.mxu0 0.0
    %1464 = vmatprep.subr.mxu0 0.0
    %1465 = vmatpush2.msra.mxu0 0.0
    %1466 = vmatprep.subr.mxu0 0.0
    %1467 = vmatpush2.msra.mxu0 0.0
    %1468 = vmatprep.subr.mxu0 0.0
    %1469 = vmatpush2.msra.mxu0 0.0
    %1470 = vmatprep.subr.mxu0 0.0
    %1471 = vmatpush2.msra.mxu0 0.0
    %1472 = vmatprep.subr.mxu0 0.0
    %1473 = vmatpush2.msra.mxu0 0.0
    %1474 = vmatprep.subr.mxu0 0.0
    %1475 = vmatpush2.msra.mxu0 0.0
    %1476 = vmatprep.subr.mxu0 0.0
    %1477 = vmatpush2.msra.mxu0 0.0
    %1478 = vmatprep.subr.mxu0 0.0
    %1479 = vmatpush2.msra.mxu0 0.0
    %1480 = vmatprep.subr.mxu0 0.0
    %1481 = vmatpush2.msra.mxu0 0.0
    %1482 = vmatprep.subr.mxu0 0.0
    %1483 = vmatpush2.msra.mxu0 0.0
    %1484 = vmatprep.subr.mxu0 0.0
    %1485 = vmatpush2.msra.mxu0 0.0
    %1486 = vmatprep.subr.mxu0 0.0
    %1487 = vmatpush2.msra.mxu0 0.0
    %1488 = vmatprep.subr.mxu0 0.0
    %1489 = vmatpush2.msra.mxu0 0.0
    %1490 = vmatprep.mubr.f32.mxu0 0.0
    %1491 = vmatmul.mubr.f32.gmra.mxu0 %v1421
    %v1492 = vpop.f32.mrf.mxu0
    %v1493 = vadd.f32 0.0, %v1492
    %v1494 = vpop.f32.mrf.mxu0
    %v1495 = vadd.f32 0.0, %v1494
    %1496 = vdwg.mxu0
    %1497 = vmatprep.subr.mxu0 0.0
    %1498 = vmatpush1.msra.mxu0 %v407
    %1499 = vmatprep.subr.mxu0 0.0
    %1500 = vmatpush1.msra.mxu0 %v404
    %1501 = vmatprep.subr.mxu0 0.0
    %1502 = vmatpush1.msra.mxu0 %v401
    %1503 = vmatprep.subr.mxu0 0.0
    %1504 = vmatpush1.msra.mxu0 %v398
    %1505 = vmatprep.subr.mxu0 0.0
    %1506 = vmatpush1.msra.mxu0 %v395
    %1507 = vmatprep.subr.mxu0 0.0
    %1508 = vmatpush1.msra.mxu0 %v392
    %1509 = vmatprep.subr.mxu0 0.0
    %1510 = vmatpush1.msra.mxu0 %v389
    %1511 = vmatprep.subr.mxu0 0.0
    %1512 = vmatpush1.msra.mxu0 %v386
    %1513 = vmatprep.subr.mxu0 0.0
    %1514 = vmatpush1.msra.mxu0 %v383
    %1515 = vmatprep.subr.mxu0 0.0
    %1516 = vmatpush1.msra.mxu0 %v380
    %1517 = vmatprep.subr.mxu0 0.0
    %1518 = vmatpush1.msra.mxu0 %v377
    %1519 = vmatprep.subr.mxu0 0.0
    %1520 = vmatpush1.msra.mxu0 %v374
    %1521 = vmatprep.subr.mxu0 0.0
    %1522 = vmatpush1.msra.mxu0 %v371
    %1523 = vmatprep.subr.mxu0 0.0
    %1524 = vmatpush1.msra.mxu0 %v368
    %1525 = vmatprep.subr.mxu0 0.0
    %1526 = vmatpush1.msra.mxu0 %v365
    %1527 = vmatprep.subr.mxu0 0.0
    %1528 = vmatpush1.msra.mxu0 %v362
    %1529 = vmatprep.subr.mxu0 0.0
    %1530 = vmatpush2.msra.mxu0 0.0
    %1531 = vmatprep.subr.mxu0 0.0
    %1532 = vmatpush2.msra.mxu0 0.0
    %1533 = vmatprep.subr.mxu0 0.0
    %1534 = vmatpush2.msra.mxu0 0.0
    %1535 = vmatprep.subr.mxu0 0.0
    %1536 = vmatpush2.msra.mxu0 0.0
    %1537 = vmatprep.subr.mxu0 0.0
    %1538 = vmatpush2.msra.mxu0 0.0
    %1539 = vmatprep.subr.mxu0 0.0
    %1540 = vmatpush2.msra.mxu0 0.0
    %1541 = vmatprep.subr.mxu0 0.0
    %1542 = vmatpush2.msra.mxu0 0.0
    %1543 = vmatprep.subr.mxu0 0.0
    %1544 = vmatpush2.msra.mxu0 0.0
    %1545 = vmatprep.subr.mxu0 0.0
    %1546 = vmatpush2.msra.mxu0 0.0
    %1547 = vmatprep.subr.mxu0 0.0
    %1548 = vmatpush2.msra.mxu0 0.0
    %1549 = vmatprep.subr.mxu0 0.0
    %1550 = vmatpush2.msra.mxu0 0.0
    %1551 = vmatprep.subr.mxu0 0.0
    %1552 = vmatpush2.msra.mxu0 0.0
    %1553 = vmatprep.subr.mxu0 0.0
    %1554 = vmatpush2.msra.mxu0 0.0
    %1555 = vmatprep.subr.mxu0 0.0
    %1556 = vmatpush2.msra.mxu0 0.0
    %1557 = vmatprep.subr.mxu0 0.0
    %1558 = vmatpush2.msra.mxu0 0.0
    %1559 = vmatprep.subr.mxu0 0.0
    %1560 = vmatpush2.msra.mxu0 0.0
    %1561 = vmatprep.mubr.f32.mxu0 0.0
    %1562 = vmatmul.mubr.f32.gmra.mxu0 %v1421
    %v1563 = vpop.f32.mrf.mxu0
    %v1564 = vadd.f32 0.0, %v1563
    %v1565 = vpop.f32.mrf.mxu0
    %1566 = vdwg.mxu0
    %v1567 = vadd.f32 %v1423, %v1493
    %v1568 = vadd.f32 %v1424, %v1495
    %v1569 = vxor.u32 %v1567, 2147483648
    %v1570 = vxor.u32 %v1568, 2147483648
    %v1571 = vmul.f32 %v1569, 1.442695
    %v1572 = vpow.pop %v1571
    %v1573 = vmul.f32 %v1570, 1.442695
    %v1574 = vpow.pop %v1573
    %v1575 = vadd.f32 %v1572, 1.0
    %v1576 = vadd.f32 %v1574, 1.0
    %v1577 = vrcp.pop %v1575
    %v1578 = vmul.f32 1.0, %v1577
    %v1579 = vrcp.pop %v1576
    %v1580 = vmul.f32 1.0, %v1579
    %v1581 = vadd.f32 %v1564, %v413
    %v1582 = vmul.f32 %v1578, %v1581
    %v1583 = vadd.f32 %v1425, %v1582
    %v1584 = vtanh.pop %v1583
    %v1585 = vsub.f32 1.0, %v1580
    %v1586 = vmul.f32 %v1585, %v1584
    %v1587 = vmul.f32 %v1580, %v1421
    %v1588 = vadd.f32 %v1586, %v1587
    %s1589 = scalar_lea.vmem [#allocation10], 24
    %1590 = vst [vmem:[%s1589] sm:$0xff] %v1588
    %s1591 = scalar_lea.vmem [#allocation2], 168
    %v1592 = vld [vmem:[%s1591] sm:$0xff]
    %v1593 = vld [vmem:[%s1591 + $0x8] sm:$0xff]
    %v1594 = vld [vmem:[%s1591 + $0x10] sm:$0xff]
    %1595 = vmatprep.subr.mxu0 %v406
    %1596 = vmatpush1.msra.mxu0 %v405
    %1597 = vmatprep.subr.mxu0 %v403
    %1598 = vmatpush1.msra.mxu0 %v402
    %1599 = vmatprep.subr.mxu0 %v400
    %1600 = vmatpush1.msra.mxu0 %v399
    %1601 = vmatprep.subr.mxu0 %v397
    %1602 = vmatpush1.msra.mxu0 %v396
    %1603 = vmatprep.subr.mxu0 %v394
    %1604 = vmatpush1.msra.mxu0 %v393
    %1605 = vmatprep.subr.mxu0 %v391
    %1606 = vmatpush1.msra.mxu0 %v390
    %1607 = vmatprep.subr.mxu0 %v388
    %1608 = vmatpush1.msra.mxu0 %v387
    %1609 = vmatprep.subr.mxu0 %v385
    %1610 = vmatpush1.msra.mxu0 %v384
    %1611 = vmatprep.subr.mxu0 %v382
    %1612 = vmatpush1.msra.mxu0 %v381
    %1613 = vmatprep.subr.mxu0 %v379
    %1614 = vmatpush1.msra.mxu0 %v378
    %1615 = vmatprep.subr.mxu0 %v376
    %1616 = vmatpush1.msra.mxu0 %v375
    %1617 = vmatprep.subr.mxu0 %v373
    %1618 = vmatpush1.msra.mxu0 %v372
    %1619 = vmatprep.subr.mxu0 %v370
    %1620 = vmatpush1.msra.mxu0 %v369
    %1621 = vmatprep.subr.mxu0 %v367
    %1622 = vmatpush1.msra.mxu0 %v366
    %1623 = vmatprep.subr.mxu0 %v364
    %1624 = vmatpush1.msra.mxu0 %v363
    %1625 = vmatprep.subr.mxu0 %v361
    %1626 = vmatpush1.msra.mxu0 %v360
    %1627 = vmatprep.subr.mxu0 0.0
    %1628 = vmatpush2.msra.mxu0 0.0
    %1629 = vmatprep.subr.mxu0 0.0
    %1630 = vmatpush2.msra.mxu0 0.0
    %1631 = vmatprep.subr.mxu0 0.0
    %1632 = vmatpush2.msra.mxu0 0.0
    %1633 = vmatprep.subr.mxu0 0.0
    %1634 = vmatpush2.msra.mxu0 0.0
    %1635 = vmatprep.subr.mxu0 0.0
    %1636 = vmatpush2.msra.mxu0 0.0
    %1637 = vmatprep.subr.mxu0 0.0
    %1638 = vmatpush2.msra.mxu0 0.0
    %1639 = vmatprep.subr.mxu0 0.0
    %1640 = vmatpush2.msra.mxu0 0.0
    %1641 = vmatprep.subr.mxu0 0.0
    %1642 = vmatpush2.msra.mxu0 0.0
    %1643 = vmatprep.subr.mxu0 0.0
    %1644 = vmatpush2.msra.mxu0 0.0
    %1645 = vmatprep.subr.mxu0 0.0
    %1646 = vmatpush2.msra.mxu0 0.0
    %1647 = vmatprep.subr.mxu0 0.0
    %1648 = vmatpush2.msra.mxu0 0.0
    %1649 = vmatprep.subr.mxu0 0.0
    %1650 = vmatpush2.msra.mxu0 0.0
    %1651 = vmatprep.subr.mxu0 0.0
    %1652 = vmatpush2.msra.mxu0 0.0
    %1653 = vmatprep.subr.mxu0 0.0
    %1654 = vmatpush2.msra.mxu0 0.0
    %1655 = vmatprep.subr.mxu0 0.0
    %1656 = vmatpush2.msra.mxu0 0.0
    %1657 = vmatprep.subr.mxu0 0.0
    %1658 = vmatpush2.msra.mxu0 0.0
    %1659 = vmatprep.mubr.f32.mxu0 0.0
    %1660 = vmatmul.mubr.f32.gmra.mxu0 %v1588
    %v1661 = vpop.f32.mrf.mxu0
    %v1662 = vadd.f32 0.0, %v1661
    %v1663 = vpop.f32.mrf.mxu0
    %v1664 = vadd.f32 0.0, %v1663
    %1665 = vdwg.mxu0
    %1666 = vmatprep.subr.mxu0 0.0
    %1667 = vmatpush1.msra.mxu0 %v407
    %1668 = vmatprep.subr.mxu0 0.0
    %1669 = vmatpush1.msra.mxu0 %v404
    %1670 = vmatprep.subr.mxu0 0.0
    %1671 = vmatpush1.msra.mxu0 %v401
    %1672 = vmatprep.subr.mxu0 0.0
    %1673 = vmatpush1.msra.mxu0 %v398
    %1674 = vmatprep.subr.mxu0 0.0
    %1675 = vmatpush1.msra.mxu0 %v395
    %1676 = vmatprep.subr.mxu0 0.0
    %1677 = vmatpush1.msra.mxu0 %v392
    %1678 = vmatprep.subr.mxu0 0.0
    %1679 = vmatpush1.msra.mxu0 %v389
    %1680 = vmatprep.subr.mxu0 0.0
    %1681 = vmatpush1.msra.mxu0 %v386
    %1682 = vmatprep.subr.mxu0 0.0
    %1683 = vmatpush1.msra.mxu0 %v383
    %1684 = vmatprep.subr.mxu0 0.0
    %1685 = vmatpush1.msra.mxu0 %v380
    %1686 = vmatprep.subr.mxu0 0.0
    %1687 = vmatpush1.msra.mxu0 %v377
    %1688 = vmatprep.subr.mxu0 0.0
    %1689 = vmatpush1.msra.mxu0 %v374
    %1690 = vmatprep.subr.mxu0 0.0
    %1691 = vmatpush1.msra.mxu0 %v371
    %1692 = vmatprep.subr.mxu0 0.0
    %1693 = vmatpush1.msra.mxu0 %v368
    %1694 = vmatprep.subr.mxu0 0.0
    %1695 = vmatpush1.msra.mxu0 %v365
    %1696 = vmatprep.subr.mxu0 0.0
    %1697 = vmatpush1.msra.mxu0 %v362
    %1698 = vmatprep.subr.mxu0 0.0
    %1699 = vmatpush2.msra.mxu0 0.0
    %1700 = vmatprep.subr.mxu0 0.0
    %1701 = vmatpush2.msra.mxu0 0.0
    %1702 = vmatprep.subr.mxu0 0.0
    %1703 = vmatpush2.msra.mxu0 0.0
    %1704 = vmatprep.subr.mxu0 0.0
    %1705 = vmatpush2.msra.mxu0 0.0
    %1706 = vmatprep.subr.mxu0 0.0
    %1707 = vmatpush2.msra.mxu0 0.0
    %1708 = vmatprep.subr.mxu0 0.0
    %1709 = vmatpush2.msra.mxu0 0.0
    %1710 = vmatprep.subr.mxu0 0.0
    %1711 = vmatpush2.msra.mxu0 0.0
    %1712 = vmatprep.subr.mxu0 0.0
    %1713 = vmatpush2.msra.mxu0 0.0
    %1714 = vmatprep.subr.mxu0 0.0
    %1715 = vmatpush2.msra.mxu0 0.0
    %1716 = vmatprep.subr.mxu0 0.0
    %1717 = vmatpush2.msra.mxu0 0.0
    %1718 = vmatprep.subr.mxu0 0.0
    %1719 = vmatpush2.msra.mxu0 0.0
    %1720 = vmatprep.subr.mxu0 0.0
    %1721 = vmatpush2.msra.mxu0 0.0
    %1722 = vmatprep.subr.mxu0 0.0
    %1723 = vmatpush2.msra.mxu0 0.0
    %1724 = vmatprep.subr.mxu0 0.0
    %1725 = vmatpush2.msra.mxu0 0.0
    %1726 = vmatprep.subr.mxu0 0.0
    %1727 = vmatpush2.msra.mxu0 0.0
    %1728 = vmatprep.subr.mxu0 0.0
    %1729 = vmatpush2.msra.mxu0 0.0
    %1730 = vmatprep.mubr.f32.mxu0 0.0
    %1731 = vmatmul.mubr.f32.gmra.mxu0 %v1588
    %v1732 = vpop.f32.mrf.mxu0
    %v1733 = vadd.f32 0.0, %v1732
    %v1734 = vpop.f32.mrf.mxu0
    %1735 = vdwg.mxu0
    %v1736 = vadd.f32 %v1592, %v1662
    %v1737 = vadd.f32 %v1593, %v1664
    %v1738 = vxor.u32 %v1736, 2147483648
    %v1739 = vxor.u32 %v1737, 2147483648
    %v1740 = vmul.f32 %v1738, 1.442695
    %v1741 = vpow.pop %v1740
    %v1742 = vmul.f32 %v1739, 1.442695
    %v1743 = vpow.pop %v1742
    %v1744 = vadd.f32 %v1741, 1.0
    %v1745 = vadd.f32 %v1743, 1.0
    %v1746 = vrcp.pop %v1744
    %v1747 = vmul.f32 1.0, %v1746
    %v1748 = vrcp.pop %v1745
    %v1749 = vmul.f32 1.0, %v1748
    %v1750 = vadd.f32 %v1733, %v413
    %v1751 = vmul.f32 %v1747, %v1750
    %v1752 = vadd.f32 %v1594, %v1751
    %v1753 = vtanh.pop %v1752
    %v1754 = vsub.f32 1.0, %v1749
    %v1755 = vmul.f32 %v1754, %v1753
    %v1756 = vmul.f32 %v1749, %v1588
    %v1757 = vadd.f32 %v1755, %v1756
    %1758 = vst [vmem:[#allocation3] sm:$0xff] %v1757
    // Predicated region
    $region38: #{tpu_custom_call.1} parent=1 // pred_check
      _
    $region39: #{tpu_custom_call.1} parent=1 // pred_check_branch
      %1760 = sbr.rel (0) target = $region41
    $region40: #{tpu_custom_call.1} parent=1 // pred_region
      %s1762 = ssub.s32 512, 512
      %1763 = vsyncadd [#allocation6], %s1762
      %s1764 = sshll.u32 [#allocation10], 4
      %s1765 = int_to_ptr.vmem [resolvable:$true] %s1764
      %1770 = dma.vmem_to_hbm [thread:$0]  %s1765, 512, %s5, [#allocation6], 128, 128, 8
    $region41: #{tpu_custom_call.1} parent=1 // pred_fallthru
      _
    // Predicated region
    $region42: #{tpu_custom_call.1} parent=1 // pred_check
      _
    $region43: #{tpu_custom_call.1} parent=1 // pred_check_branch
      %1772 = sbr.rel (0) target = $region45
    $region44: #{tpu_custom_call.1} parent=1 // pred_region
      %1773 = dma.done [#allocation6], 512
    $region45: #{tpu_custom_call.1} parent=1 // pred_fallthru
      _
    %1774 = vsyncpa [#allocation5], 1
    %1775 = vsyncpa [#allocation8], 1
    %1776 = vsyncpa [#allocation6], 1

</llo_original>
